<compile_context>
chip_gen: v7x
topology: tpu7x:2x2x1
jax: 0.10.0
libtpu: 0.0.40
codegen_flags: <defaults>
</compile_context>

<pallas_src>
import numpy as np
import jax
import jax.numpy as jnp
from jax import lax
from jax.experimental import pallas as pl
from jax.experimental.pallas import tpu as pltpu

BN_EPS = 1e-5


def _round_up(x, m):
    return ((x + m - 1) // m) * m


# --------------------------------------------------------------------------
# Pallas kernel (one batch sample x one row tile):
#   conv3x3 (3 per-kh bf16 MXU dots, f32 acc) -> BN1 -> ReLU
#   -> convT 2x2 s2 (4 sub-pixels; VPU FMAs or MXU) -> BN2(+bias) -> ReLU
#   -> convT 2x2 s2 (16 sub-pixel channels, block-diag; VPU FMAs or MXU)
#   -> sigmoid (EUP tanh form)
# --------------------------------------------------------------------------
def make_head_kernel(Wp, L_out, Cin, Cm, use_mxu_for_small):
    K3 = 3 * Cin

    def head_kernel(xt_ref, w1_ref, s1_ref, b1_ref, wt1_ref, s2_ref, b2_ref,
                    w2_ref, bt2_ref, out_ref):
        # ---- conv1 (3x3, padding=1): per-kh accumulation, no big im2col ----
        # xt_ref is a (Cin, L_in) bf16 flattened halo row-tile; tap (kh, kw)
        # is the lane-shifted window starting at kh*Wp + kw.
        acc = None
        for kh in range(3):
            blk = jnp.concatenate(
                [xt_ref[:, kh * Wp + kw: kh * Wp + kw + L_out]
                 for kw in range(3)], axis=0)                   # (3*Cin, L_out) bf16
            part = jnp.dot(w1_ref[:, kh * K3:(kh + 1) * K3], blk,
                           preferred_element_type=jnp.float32)  # (Cm, L_out) f32
            acc = part if acc is None else acc + part

        # ---- BN1 (folded) + ReLU (f32 elementwise) ----
        y = jnp.maximum(acc * s1_ref[...] + b1_ref[...], 0.0)

        # ---- convT1 (2x2, stride 2): 4 sub-pixels stacked as (4*Cm, Cm) ----
        if use_mxu_for_small:
            z = jnp.dot(wt1_ref[...].astype(jnp.bfloat16),
                        y.astype(jnp.bfloat16),
                        preferred_element_type=jnp.float32)
        else:
            # tiny M/K: unrolled VPU broadcast-FMAs instead of an MXU dot
            w = wt1_ref[...]                                    # (4*Cm, Cm) f32
            z = w[:, 0:1] * y[0:1, :]
            for c in range(1, Cm):
                z = z + w[:, c:c + 1] * y[c:c + 1, :]
        # BN2 folded (convT1 bias absorbed) + ReLU
        z = jnp.maximum(z * s2_ref[...] + b2_ref[...], 0.0)

        # ---- convT2 (2x2, stride 2): block-diag (16, 4*Cm), rows already in
        #      the final sub-pixel order k = ((a*2+b)*2 + a2)*2 + b2 ----
        if use_mxu_for_small:
            v = jnp.dot(w2_ref[...].astype(jnp.bfloat16),
                        z.astype(jnp.bfloat16),
                        preferred_element_type=jnp.float32)
        else:
            w2 = w2_ref[...]                                    # (16, 4*Cm) f32
            v = w2[:, 0:1] * z[0:1, :]
            for c in range(1, 4 * Cm):
                v = v + w2[:, c:c + 1] * z[c:c + 1, :]
        v = v + bt2_ref[...]

        # sigmoid(x) = 0.5*(tanh(x/2)+1): transcendental on the EUP slot
        out_ref[...] = 0.5 * (jnp.tanh(0.5 * v) + 1.0)

    return head_kernel


# --------------------------------------------------------------------------
# Wrapper: pad + flatten + halo row tiles (bf16), pallas_call over (N, tiles),
# drop junk lanes/columns, pixel-shuffle back to (N, 1, 4H, 4W) NCHW.
# --------------------------------------------------------------------------
def db_head_forward(x_nchw, p, tr=8):
    """x_nchw: (N, Cin, H, W) float32 -> (N, 1, 4H, 4W) float32."""
    N, Cin, H, W = x_nchw.shape
    Cm = Cin // 4
    if H % tr != 0:            # simple fallback: one row tile per sample
        tr = H
    n_t = H // tr
    Wp = W + 2                                   # 1 col pad each side
    L_out = _round_up(tr * Wp, 128)              # lane-dense, unmasked stores
    L_in = 2 * Wp + 2 + L_out                    # max tap start (2*Wp+2) + width
    Lflat = (n_t - 1) * tr * Wp + L_in           # flat extent the tiles draw from

    # pad rows (1,1) + cols (1,1), flatten spatial, bf16 for the MXU operand
    xb = x_nchw.astype(jnp.bfloat16)
    xf = jnp.pad(xb, ((0, 0), (0, 0), (1, 1), (1, 1)))
    xf = xf.reshape(N, Cin, (H + 2) * Wp)
    xf = jnp.pad(xf, ((0, 0), (0, 0), (0, Lflat - (H + 2) * Wp)))
    # overlapping (halo'd) row tiles, materialized once in bf16
    xtiles = jnp.stack([xf[:, :, t * tr * Wp: t * tr * Wp + L_in]
                        for t in range(n_t)], axis=1)     # (N, n_t, Cin, L_in)

    use_mxu_for_small = Cm >= 64
    kernel = make_head_kernel(Wp, L_out, Cin, Cm, use_mxu_for_small)

    out = pl.pallas_call(
        kernel,
        out_shape=jax.ShapeDtypeStruct((N, n_t, 16, L_out), jnp.float32),
        grid=(N, n_t),
        in_specs=[
            pl.BlockSpec((None, None, Cin, L_in), lambda n, t: (n, t, 0, 0)),
            pl.BlockSpec((Cm, 9 * Cin), lambda n, t: (0, 0)),
            pl.BlockSpec((Cm, 1), lambda n, t: (0, 0)),
            pl.BlockSpec((Cm, 1), lambda n, t: (0, 0)),
            pl.BlockSpec((4 * Cm, Cm), lambda n, t: (0, 0)),
            pl.BlockSpec((4 * Cm, 1), lambda n, t: (0, 0)),
            pl.BlockSpec((4 * Cm, 1), lambda n, t: (0, 0)),
            pl.BlockSpec((16, 4 * Cm), lambda n, t: (0, 0)),
            pl.BlockSpec((16, 1), lambda n, t: (0, 0)),
        ],
        out_specs=pl.BlockSpec((None, None, 16, L_out),
                               lambda n, t: (n, t, 0, 0)),
        compiler_params=pltpu.CompilerParams(
            dimension_semantics=("parallel", "parallel"),
            # explicit scoped-VMEM budget; safe on every generation at these
            # block sizes (raise toward 64-100 MiB on v5e/v6e with large Tr)
            vmem_limit_bytes=32 * 1024 * 1024),
    )(xtiles, p["w1f"].astype(jnp.bfloat16), p["s1"], p["b1"], p["wt1s"],
      p["s2t"], p["b2t"], p["w2b"], p["bt2b"])

    # (N, n_t, 16, L_out): keep the tr*Wp real lanes, split channels into
    # (a, b, a2, b2), lanes into (tr, Wp), drop junk cols, pixel-shuffle.
    out = out[:, :, :, :tr * Wp].reshape(N, n_t, 2, 2, 2, 2, tr, Wp)[..., :W]
    out = jnp.transpose(out, (0, 1, 6, 2, 4, 7, 3, 5))  # N, t, r, a, a2, w, b, b2
    out = out.reshape(N, 4 * H, 4 * W)
    return out[:, None, :, :]                            # NCHW


# --------------------------------------------------------------------------
# Deterministic synthetic parameters (PyTorch layouts) + kernel-side fused
# weights: conv1 tap-major (Cm, 9*Cin), stacked convT1 (4*Cm, Cm),
# block-diagonal convT2 (16, 4*Cm), BN folded to scale/bias (convT1 bias
# absorbed into the BN2 affine).
# --------------------------------------------------------------------------
def make_params(key, in_channels):
    Cin = in_channels
    Cm = in_channels // 4
    ks = jax.random.split(key, 16)
    raw = dict(
        w1_oihw=0.2 * jax.random.normal(ks[0], (Cm, Cin, 3, 3), jnp.float32),
        g1=1.0 + 0.1 * jax.random.normal(ks[1], (Cm,), jnp.float32),
        beta1=0.1 * jax.random.normal(ks[2], (Cm,), jnp.float32),
        rm1=0.1 * jax.random.normal(ks[3], (Cm,), jnp.float32),
        rv1=jax.random.uniform(ks[4], (Cm,), jnp.float32, 0.5, 1.5),
        wt1_raw=0.2 * jax.random.normal(ks[5], (Cm, Cm, 2, 2), jnp.float32),
        bt1=0.1 * jax.random.normal(ks[6], (Cm,), jnp.float32),
        g2=1.0 + 0.1 * jax.random.normal(ks[7], (Cm,), jnp.float32),
        beta2=0.1 * jax.random.normal(ks[8], (Cm,), jnp.float32),
        rm2=0.1 * jax.random.normal(ks[9], (Cm,), jnp.float32),
        rv2=jax.random.uniform(ks[10], (Cm,), jnp.float32, 0.5, 1.5),
        wt2_raw=0.2 * jax.random.normal(ks[11], (Cm, 1, 2, 2), jnp.float32),
        bt2=0.1 * jax.random.normal(ks[12], (1,), jnp.float32),
    )
    s1 = raw["g1"] / jnp.sqrt(raw["rv1"] + BN_EPS)
    b1 = raw["beta1"] - raw["rm1"] * s1
    s2 = raw["g2"] / jnp.sqrt(raw["rv2"] + BN_EPS)
    b2 = raw["beta2"] - raw["rm2"] * s2

    # conv1: (Cm, Cin, 3, 3) -> (Cm, 9*Cin); rows are (kh, kw)-major then Cin,
    # matching the kernel's per-kh tap-concatenate order.
    w1f = jnp.transpose(raw["w1_oihw"], (0, 2, 3, 1)).reshape(Cm, 9 * Cin)

    # convT1: (Cin=Cm, Cout=Cm, 2, 2) -> (4*Cm, Cm), row = (a*2+b)*Cm + o.
    wt1s = jnp.transpose(raw["wt1_raw"], (2, 3, 1, 0)).reshape(4 * Cm, Cm)

    # BN2 folded with convT1 bias absorbed: s2*(z + bt1) + b2
    s2t = jnp.tile(s2, 4).reshape(4 * Cm, 1)
    b2t = jnp.tile(s2 * raw["bt1"] + b2, 4).reshape(4 * Cm, 1)

    # convT2: (Cm, 1, 2, 2) -> per-subpixel (4, Cm), then block-diagonal
    # (16, 4*Cm) so output row k = ((a*2+b)*2 + a2)*2 + b2.
    w2_tap = jnp.transpose(raw["wt2_raw"][:, 0], (1, 2, 0)).reshape(4, Cm)
    w2b = jnp.kron(jnp.eye(4, dtype=jnp.float32), w2_tap)
    bt2b = jnp.broadcast_to(raw["bt2"], (16,)).reshape(16, 1)

    kern = dict(
        w1f=w1f,
        s1=s1.reshape(Cm, 1), b1=b1.reshape(Cm, 1),
        wt1s=wt1s, s2t=s2t, b2t=b2t,
        w2b=w2b, bt2b=bt2b,
    )
    return raw, kern


# --------------------------------------------------------------------------
# Pure-JAX reference (eval-mode BN) for correctness checks.
# --------------------------------------------------------------------------
def reference(x_nchw, raw):
    x = jnp.transpose(x_nchw, (0, 2, 3, 1)).astype(jnp.float32)
    N, H, W, Cin = x.shape
    Cm = raw["w1_oihw"].shape[0]
    w1_hwio = jnp.transpose(raw["w1_oihw"], (2, 3, 1, 0))
    y = lax.conv_general_dilated(x, w1_hwio, (1, 1), "SAME",
                                 dimension_numbers=("NHWC", "HWIO", "NHWC"))
    s1 = raw["g1"] / jnp.sqrt(raw["rv1"] + BN_EPS)
    y = jnp.maximum(y * s1 + (raw["beta1"] - raw["rm1"] * s1), 0.0)

    t = jnp.einsum("nijc,coab->niajbo", y, raw["wt1_raw"])
    t = t.reshape(N, 2 * H, 2 * W, Cm) + raw["bt1"]
    s2 = raw["g2"] / jnp.sqrt(raw["rv2"] + BN_EPS)
    t = jnp.maximum(t * s2 + (raw["beta2"] - raw["rm2"] * s2), 0.0)

    u = jnp.einsum("nijc,coab->niajbo", t, raw["wt2_raw"])
    u = u.reshape(N, 4 * H, 4 * W, 1) + raw["bt2"]
    u = jax.nn.sigmoid(u)
    return jnp.transpose(u, (0, 3, 1, 2))               # NCHW


if __name__ == "__main__":
    N, Cin, H, W = 2, 16, 16, 16
    key = jax.random.PRNGKey(0)
    k_x, k_p = jax.random.split(key)
    x = jax.random.normal(k_x, (N, Cin, H, W), jnp.float32)   # NCHW like torch

    raw, kern = make_params(k_p, Cin)

    out = jax.block_until_ready(db_head_forward(x, kern, tr=8))
    assert out.shape == (N, 1, 4 * H, 4 * W), out.shape

    # Tight structural check: reference fed the same bf16-rounded conv1
    # operands the kernel uses (isolates only summation-order differences).
    raw_bf = dict(raw)
    raw_bf["w1_oihw"] = raw["w1_oihw"].astype(jnp.bfloat16).astype(jnp.float32)
    x_bf = x.astype(jnp.bfloat16).astype(jnp.float32)
    ref_matched = jax.block_until_ready(reference(x_bf, raw_bf))
    np.testing.assert_allclose(np.asarray(out), np.asarray(ref_matched),
                               rtol=2e-3, atol=2e-3)

    # Loose check vs exact f32 module semantics (slack = bf16 MXU operands).
    ref = jax.block_until_ready(reference(x, raw))
    np.testing.assert_allclose(np.asarray(out), np.asarray(ref),
                               rtol=0.0, atol=3e-2)
    print("KERNEL_OK")
</pallas_src>

<mosaic_0001>
module attributes {stable_mosaic.version = 11 : i64} {
  func.func @head_kernel(%arg0: i32, %arg1: i32, %arg2: memref<1x1x16x294xbf16, #tpu.memory_space<vmem>>, %arg3: memref<4x144xbf16, #tpu.memory_space<vmem>>, %arg4: memref<4x1xf32, #tpu.memory_space<vmem>>, %arg5: memref<4x1xf32, #tpu.memory_space<vmem>>, %arg6: memref<16x4xf32, #tpu.memory_space<vmem>>, %arg7: memref<16x1xf32, #tpu.memory_space<vmem>>, %arg8: memref<16x1xf32, #tpu.memory_space<vmem>>, %arg9: memref<16x16xf32, #tpu.memory_space<vmem>>, %arg10: memref<16x1xf32, #tpu.memory_space<vmem>>, %arg11: memref<1x1x16x256xf32, #tpu.memory_space<vmem>>) attributes {dimension_semantics = [#tpu.dimension_semantics<parallel>, #tpu.dimension_semantics<parallel>], iteration_bounds = array<i64: 2, 2>, scalar_prefetch = 0 : i64, scratch_operands = 0 : i64, tpu.core_type = #tpu.core_type<tc>, window_params = [{transform_indices = @transform_0, window_bounds = array<i64: 1, 1, 16, 294>}, {pipeline_mode = #tpu.pipeline_mode<synchronous>, transform_indices = @transform_1, window_bounds = array<i64: 4, 144>}, {pipeline_mode = #tpu.pipeline_mode<synchronous>, transform_indices = @transform_2, window_bounds = array<i64: 4, 1>}, {pipeline_mode = #tpu.pipeline_mode<synchronous>, transform_indices = @transform_3, window_bounds = array<i64: 4, 1>}, {pipeline_mode = #tpu.pipeline_mode<synchronous>, transform_indices = @transform_4, window_bounds = array<i64: 16, 4>}, {pipeline_mode = #tpu.pipeline_mode<synchronous>, transform_indices = @transform_5, window_bounds = array<i64: 16, 1>}, {pipeline_mode = #tpu.pipeline_mode<synchronous>, transform_indices = @transform_6, window_bounds = array<i64: 16, 1>}, {pipeline_mode = #tpu.pipeline_mode<synchronous>, transform_indices = @transform_7, window_bounds = array<i64: 16, 16>}, {pipeline_mode = #tpu.pipeline_mode<synchronous>, transform_indices = @transform_8, window_bounds = array<i64: 16, 1>}, {transform_indices = @transform_9, window_bounds = array<i64: 1, 1, 16, 256>}]} {
    %c0 = arith.constant 0 : index
    %c0_0 = arith.constant 0 : index
    %c0_1 = arith.constant 0 : index
    %c0_2 = arith.constant 0 : index
    %0 = vector.load %arg2[%c0, %c0_0, %c0_1, %c0_2] : memref<1x1x16x294xbf16, #tpu.memory_space<vmem>>, vector<1x1x16x256xbf16>
    %1 = vector.shape_cast %0 : vector<1x1x16x256xbf16> to vector<16x256xbf16>
    %c0_3 = arith.constant 0 : index
    %c0_4 = arith.constant 0 : index
    %c0_5 = arith.constant 0 : index
    %c1 = arith.constant 1 : index
    %2 = vector.load %arg2[%c0_3, %c0_4, %c0_5, %c1] : memref<1x1x16x294xbf16, #tpu.memory_space<vmem>>, vector<1x1x16x256xbf16>
    %3 = vector.shape_cast %2 : vector<1x1x16x256xbf16> to vector<16x256xbf16>
    %c0_6 = arith.constant 0 : index
    %c0_7 = arith.constant 0 : index
    %c0_8 = arith.constant 0 : index
    %c2 = arith.constant 2 : index
    %4 = vector.load %arg2[%c0_6, %c0_7, %c0_8, %c2] : memref<1x1x16x294xbf16, #tpu.memory_space<vmem>>, vector<1x1x16x256xbf16>
    %5 = vector.shape_cast %4 : vector<1x1x16x256xbf16> to vector<16x256xbf16>
    %6 = tpu.concatenate %1, %3, %5 in 0 : vector<16x256xbf16>, vector<16x256xbf16>, vector<16x256xbf16> -> vector<48x256xbf16>
    %c0_9 = arith.constant 0 : index
    %c0_10 = arith.constant 0 : index
    %7 = vector.load %arg3[%c0_9, %c0_10] : memref<4x144xbf16, #tpu.memory_space<vmem>>, vector<4x48xbf16>
    %cst = arith.constant dense<0.000000e+00> : vector<4x256xf32>
    %8 = tpu.matmul %7, %6, %cst {dimension_numbers = #tpu.dot_dimension_numbers<[1], [0], [0], [1], [0, 0, 1, 1], [], []>} : vector<4x48xbf16>, vector<48x256xbf16>, vector<4x256xf32> -> vector<4x256xf32>
    %c0_11 = arith.constant 0 : index
    %c0_12 = arith.constant 0 : index
    %c0_13 = arith.constant 0 : index
    %c18 = arith.constant 18 : index
    %9 = vector.load %arg2[%c0_11, %c0_12, %c0_13, %c18] : memref<1x1x16x294xbf16, #tpu.memory_space<vmem>>, vector<1x1x16x256xbf16>
    %10 = vector.shape_cast %9 : vector<1x1x16x256xbf16> to vector<16x256xbf16>
    %c0_14 = arith.constant 0 : index
    %c0_15 = arith.constant 0 : index
    %c0_16 = arith.constant 0 : index
    %c19 = arith.constant 19 : index
    %11 = vector.load %arg2[%c0_14, %c0_15, %c0_16, %c19] : memref<1x1x16x294xbf16, #tpu.memory_space<vmem>>, vector<1x1x16x256xbf16>
    %12 = vector.shape_cast %11 : vector<1x1x16x256xbf16> to vector<16x256xbf16>
    %c0_17 = arith.constant 0 : index
    %c0_18 = arith.constant 0 : index
    %c0_19 = arith.constant 0 : index
    %c20 = arith.constant 20 : index
    %13 = vector.load %arg2[%c0_17, %c0_18, %c0_19, %c20] : memref<1x1x16x294xbf16, #tpu.memory_space<vmem>>, vector<1x1x16x256xbf16>
    %14 = vector.shape_cast %13 : vector<1x1x16x256xbf16> to vector<16x256xbf16>
    %15 = tpu.concatenate %10, %12, %14 in 0 : vector<16x256xbf16>, vector<16x256xbf16>, vector<16x256xbf16> -> vector<48x256xbf16>
    %c0_20 = arith.constant 0 : index
    %c48 = arith.constant 48 : index
    %16 = vector.load %arg3[%c0_20, %c48] : memref<4x144xbf16, #tpu.memory_space<vmem>>, vector<4x48xbf16>
    %cst_21 = arith.constant dense<0.000000e+00> : vector<4x256xf32>
    %17 = tpu.matmul %16, %15, %cst_21 {dimension_numbers = #tpu.dot_dimension_numbers<[1], [0], [0], [1], [0, 0, 1, 1], [], []>} : vector<4x48xbf16>, vector<48x256xbf16>, vector<4x256xf32> -> vector<4x256xf32>
    %18 = arith.addf %8, %17 : vector<4x256xf32>
    %c0_22 = arith.constant 0 : index
    %c0_23 = arith.constant 0 : index
    %c0_24 = arith.constant 0 : index
    %c36 = arith.constant 36 : index
    %19 = vector.load %arg2[%c0_22, %c0_23, %c0_24, %c36] : memref<1x1x16x294xbf16, #tpu.memory_space<vmem>>, vector<1x1x16x256xbf16>
    %20 = vector.shape_cast %19 : vector<1x1x16x256xbf16> to vector<16x256xbf16>
    %c0_25 = arith.constant 0 : index
    %c0_26 = arith.constant 0 : index
    %c0_27 = arith.constant 0 : index
    %c37 = arith.constant 37 : index
    %21 = vector.load %arg2[%c0_25, %c0_26, %c0_27, %c37] : memref<1x1x16x294xbf16, #tpu.memory_space<vmem>>, vector<1x1x16x256xbf16>
    %22 = vector.shape_cast %21 : vector<1x1x16x256xbf16> to vector<16x256xbf16>
    %c0_28 = arith.constant 0 : index
    %c0_29 = arith.constant 0 : index
    %c0_30 = arith.constant 0 : index
    %c38 = arith.constant 38 : index
    %23 = vector.load %arg2[%c0_28, %c0_29, %c0_30, %c38] : memref<1x1x16x294xbf16, #tpu.memory_space<vmem>>, vector<1x1x16x256xbf16>
    %24 = vector.shape_cast %23 : vector<1x1x16x256xbf16> to vector<16x256xbf16>
    %25 = tpu.concatenate %20, %22, %24 in 0 : vector<16x256xbf16>, vector<16x256xbf16>, vector<16x256xbf16> -> vector<48x256xbf16>
    %c0_31 = arith.constant 0 : index
    %c96 = arith.constant 96 : index
    %26 = vector.load %arg3[%c0_31, %c96] : memref<4x144xbf16, #tpu.memory_space<vmem>>, vector<4x48xbf16>
    %cst_32 = arith.constant dense<0.000000e+00> : vector<4x256xf32>
    %27 = tpu.matmul %26, %25, %cst_32 {dimension_numbers = #tpu.dot_dimension_numbers<[1], [0], [0], [1], [0, 0, 1, 1], [], []>} : vector<4x48xbf16>, vector<48x256xbf16>, vector<4x256xf32> -> vector<4x256xf32>
    %28 = arith.addf %18, %27 : vector<4x256xf32>
    %c0_33 = arith.constant 0 : index
    %c0_34 = arith.constant 0 : index
    %29 = vector.load %arg4[%c0_33, %c0_34] : memref<4x1xf32, #tpu.memory_space<vmem>>, vector<4x1xf32>
    %30 = vector.broadcast %29 : vector<4x1xf32> to vector<4x256xf32>
    %31 = arith.mulf %28, %30 : vector<4x256xf32>
    %c0_35 = arith.constant 0 : index
    %c0_36 = arith.constant 0 : index
    %32 = vector.load %arg5[%c0_35, %c0_36] : memref<4x1xf32, #tpu.memory_space<vmem>>, vector<4x1xf32>
    %33 = vector.broadcast %32 : vector<4x1xf32> to vector<4x256xf32>
    %34 = arith.addf %31, %33 : vector<4x256xf32>
    %cst_37 = arith.constant 0.000000e+00 : f32
    %35 = vector.broadcast %cst_37 : f32 to vector<4x256xf32>
    %36 = arith.maximumf %34, %35 : vector<4x256xf32>
    %c0_38 = arith.constant 0 : index
    %c0_39 = arith.constant 0 : index
    %37 = vector.load %arg6[%c0_38, %c0_39] : memref<16x4xf32, #tpu.memory_space<vmem>>, vector<16x4xf32>
    %38 = vector.extract_strided_slice %37 {offsets = [0, 0], sizes = [16, 1], strides = [1, 1]} : vector<16x4xf32> to vector<16x1xf32>
    %39 = vector.extract_strided_slice %36 {offsets = [0, 0], sizes = [1, 256], strides = [1, 1]} : vector<4x256xf32> to vector<1x256xf32>
    %40 = vector.broadcast %38 : vector<16x1xf32> to vector<16x256xf32>
    %41 = vector.broadcast %39 : vector<1x256xf32> to vector<16x256xf32>
    %42 = arith.mulf %40, %41 : vector<16x256xf32>
    %43 = vector.extract_strided_slice %37 {offsets = [0, 1], sizes = [16, 1], strides = [1, 1]} : vector<16x4xf32> to vector<16x1xf32>
    %44 = vector.extract_strided_slice %36 {offsets = [1, 0], sizes = [1, 256], strides = [1, 1]} : vector<4x256xf32> to vector<1x256xf32>
    %45 = vector.broadcast %43 : vector<16x1xf32> to vector<16x256xf32>
    %46 = vector.broadcast %44 : vector<1x256xf32> to vector<16x256xf32>
    %47 = arith.mulf %45, %46 : vector<16x256xf32>
    %48 = arith.addf %42, %47 : vector<16x256xf32>
    %49 = vector.extract_strided_slice %37 {offsets = [0, 2], sizes = [16, 1], strides = [1, 1]} : vector<16x4xf32> to vector<16x1xf32>
    %50 = vector.extract_strided_slice %36 {offsets = [2, 0], sizes = [1, 256], strides = [1, 1]} : vector<4x256xf32> to vector<1x256xf32>
    %51 = vector.broadcast %49 : vector<16x1xf32> to vector<16x256xf32>
    %52 = vector.broadcast %50 : vector<1x256xf32> to vector<16x256xf32>
    %53 = arith.mulf %51, %52 : vector<16x256xf32>
    %54 = arith.addf %48, %53 : vector<16x256xf32>
    %55 = vector.extract_strided_slice %37 {offsets = [0, 3], sizes = [16, 1], strides = [1, 1]} : vector<16x4xf32> to vector<16x1xf32>
    %56 = vector.extract_strided_slice %36 {offsets = [3, 0], sizes = [1, 256], strides = [1, 1]} : vector<4x256xf32> to vector<1x256xf32>
    %57 = vector.broadcast %55 : vector<16x1xf32> to vector<16x256xf32>
    %58 = vector.broadcast %56 : vector<1x256xf32> to vector<16x256xf32>
    %59 = arith.mulf %57, %58 : vector<16x256xf32>
    %60 = arith.addf %54, %59 : vector<16x256xf32>
    %c0_40 = arith.constant 0 : index
    %c0_41 = arith.constant 0 : index
    %61 = vector.load %arg7[%c0_40, %c0_41] : memref<16x1xf32, #tpu.memory_space<vmem>>, vector<16x1xf32>
    %62 = vector.broadcast %61 : vector<16x1xf32> to vector<16x256xf32>
    %63 = arith.mulf %60, %62 : vector<16x256xf32>
    %c0_42 = arith.constant 0 : index
    %c0_43 = arith.constant 0 : index
    %64 = vector.load %arg8[%c0_42, %c0_43] : memref<16x1xf32, #tpu.memory_space<vmem>>, vector<16x1xf32>
    %65 = vector.broadcast %64 : vector<16x1xf32> to vector<16x256xf32>
    %66 = arith.addf %63, %65 : vector<16x256xf32>
    %cst_44 = arith.constant 0.000000e+00 : f32
    %67 = vector.broadcast %cst_44 : f32 to vector<16x256xf32>
    %68 = arith.maximumf %66, %67 : vector<16x256xf32>
    %c0_45 = arith.constant 0 : index
    %c0_46 = arith.constant 0 : index
    %69 = vector.load %arg9[%c0_45, %c0_46] : memref<16x16xf32, #tpu.memory_space<vmem>>, vector<16x16xf32>
    %70 = vector.extract_strided_slice %69 {offsets = [0, 0], sizes = [16, 1], strides = [1, 1]} : vector<16x16xf32> to vector<16x1xf32>
    %71 = vector.extract_strided_slice %68 {offsets = [0, 0], sizes = [1, 256], strides = [1, 1]} : vector<16x256xf32> to vector<1x256xf32>
    %72 = vector.broadcast %70 : vector<16x1xf32> to vector<16x256xf32>
    %73 = vector.broadcast %71 : vector<1x256xf32> to vector<16x256xf32>
    %74 = arith.mulf %72, %73 : vector<16x256xf32>
    %75 = vector.extract_strided_slice %69 {offsets = [0, 1], sizes = [16, 1], strides = [1, 1]} : vector<16x16xf32> to vector<16x1xf32>
    %76 = vector.extract_strided_slice %68 {offsets = [1, 0], sizes = [1, 256], strides = [1, 1]} : vector<16x256xf32> to vector<1x256xf32>
    %77 = vector.broadcast %75 : vector<16x1xf32> to vector<16x256xf32>
    %78 = vector.broadcast %76 : vector<1x256xf32> to vector<16x256xf32>
    %79 = arith.mulf %77, %78 : vector<16x256xf32>
    %80 = arith.addf %74, %79 : vector<16x256xf32>
    %81 = vector.extract_strided_slice %69 {offsets = [0, 2], sizes = [16, 1], strides = [1, 1]} : vector<16x16xf32> to vector<16x1xf32>
    %82 = vector.extract_strided_slice %68 {offsets = [2, 0], sizes = [1, 256], strides = [1, 1]} : vector<16x256xf32> to vector<1x256xf32>
    %83 = vector.broadcast %81 : vector<16x1xf32> to vector<16x256xf32>
    %84 = vector.broadcast %82 : vector<1x256xf32> to vector<16x256xf32>
    %85 = arith.mulf %83, %84 : vector<16x256xf32>
    %86 = arith.addf %80, %85 : vector<16x256xf32>
    %87 = vector.extract_strided_slice %69 {offsets = [0, 3], sizes = [16, 1], strides = [1, 1]} : vector<16x16xf32> to vector<16x1xf32>
    %88 = vector.extract_strided_slice %68 {offsets = [3, 0], sizes = [1, 256], strides = [1, 1]} : vector<16x256xf32> to vector<1x256xf32>
    %89 = vector.broadcast %87 : vector<16x1xf32> to vector<16x256xf32>
    %90 = vector.broadcast %88 : vector<1x256xf32> to vector<16x256xf32>
    %91 = arith.mulf %89, %90 : vector<16x256xf32>
    %92 = arith.addf %86, %91 : vector<16x256xf32>
    %93 = vector.extract_strided_slice %69 {offsets = [0, 4], sizes = [16, 1], strides = [1, 1]} : vector<16x16xf32> to vector<16x1xf32>
    %94 = vector.extract_strided_slice %68 {offsets = [4, 0], sizes = [1, 256], strides = [1, 1]} : vector<16x256xf32> to vector<1x256xf32>
    %95 = vector.broadcast %93 : vector<16x1xf32> to vector<16x256xf32>
    %96 = vector.broadcast %94 : vector<1x256xf32> to vector<16x256xf32>
    %97 = arith.mulf %95, %96 : vector<16x256xf32>
    %98 = arith.addf %92, %97 : vector<16x256xf32>
    %99 = vector.extract_strided_slice %69 {offsets = [0, 5], sizes = [16, 1], strides = [1, 1]} : vector<16x16xf32> to vector<16x1xf32>
    %100 = vector.extract_strided_slice %68 {offsets = [5, 0], sizes = [1, 256], strides = [1, 1]} : vector<16x256xf32> to vector<1x256xf32>
    %101 = vector.broadcast %99 : vector<16x1xf32> to vector<16x256xf32>
    %102 = vector.broadcast %100 : vector<1x256xf32> to vector<16x256xf32>
    %103 = arith.mulf %101, %102 : vector<16x256xf32>
    %104 = arith.addf %98, %103 : vector<16x256xf32>
    %105 = vector.extract_strided_slice %69 {offsets = [0, 6], sizes = [16, 1], strides = [1, 1]} : vector<16x16xf32> to vector<16x1xf32>
    %106 = vector.extract_strided_slice %68 {offsets = [6, 0], sizes = [1, 256], strides = [1, 1]} : vector<16x256xf32> to vector<1x256xf32>
    %107 = vector.broadcast %105 : vector<16x1xf32> to vector<16x256xf32>
    %108 = vector.broadcast %106 : vector<1x256xf32> to vector<16x256xf32>
    %109 = arith.mulf %107, %108 : vector<16x256xf32>
    %110 = arith.addf %104, %109 : vector<16x256xf32>
    %111 = vector.extract_strided_slice %69 {offsets = [0, 7], sizes = [16, 1], strides = [1, 1]} : vector<16x16xf32> to vector<16x1xf32>
    %112 = vector.extract_strided_slice %68 {offsets = [7, 0], sizes = [1, 256], strides = [1, 1]} : vector<16x256xf32> to vector<1x256xf32>
    %113 = vector.broadcast %111 : vector<16x1xf32> to vector<16x256xf32>
    %114 = vector.broadcast %112 : vector<1x256xf32> to vector<16x256xf32>
    %115 = arith.mulf %113, %114 : vector<16x256xf32>
    %116 = arith.addf %110, %115 : vector<16x256xf32>
    %117 = vector.extract_strided_slice %69 {offsets = [0, 8], sizes = [16, 1], strides = [1, 1]} : vector<16x16xf32> to vector<16x1xf32>
    %118 = vector.extract_strided_slice %68 {offsets = [8, 0], sizes = [1, 256], strides = [1, 1]} : vector<16x256xf32> to vector<1x256xf32>
    %119 = vector.broadcast %117 : vector<16x1xf32> to vector<16x256xf32>
    %120 = vector.broadcast %118 : vector<1x256xf32> to vector<16x256xf32>
    %121 = arith.mulf %119, %120 : vector<16x256xf32>
    %122 = arith.addf %116, %121 : vector<16x256xf32>
    %123 = vector.extract_strided_slice %69 {offsets = [0, 9], sizes = [16, 1], strides = [1, 1]} : vector<16x16xf32> to vector<16x1xf32>
    %124 = vector.extract_strided_slice %68 {offsets = [9, 0], sizes = [1, 256], strides = [1, 1]} : vector<16x256xf32> to vector<1x256xf32>
    %125 = vector.broadcast %123 : vector<16x1xf32> to vector<16x256xf32>
    %126 = vector.broadcast %124 : vector<1x256xf32> to vector<16x256xf32>
    %127 = arith.mulf %125, %126 : vector<16x256xf32>
    %128 = arith.addf %122, %127 : vector<16x256xf32>
    %129 = vector.extract_strided_slice %69 {offsets = [0, 10], sizes = [16, 1], strides = [1, 1]} : vector<16x16xf32> to vector<16x1xf32>
    %130 = vector.extract_strided_slice %68 {offsets = [10, 0], sizes = [1, 256], strides = [1, 1]} : vector<16x256xf32> to vector<1x256xf32>
    %131 = vector.broadcast %129 : vector<16x1xf32> to vector<16x256xf32>
    %132 = vector.broadcast %130 : vector<1x256xf32> to vector<16x256xf32>
    %133 = arith.mulf %131, %132 : vector<16x256xf32>
    %134 = arith.addf %128, %133 : vector<16x256xf32>
    %135 = vector.extract_strided_slice %69 {offsets = [0, 11], sizes = [16, 1], strides = [1, 1]} : vector<16x16xf32> to vector<16x1xf32>
    %136 = vector.extract_strided_slice %68 {offsets = [11, 0], sizes = [1, 256], strides = [1, 1]} : vector<16x256xf32> to vector<1x256xf32>
    %137 = vector.broadcast %135 : vector<16x1xf32> to vector<16x256xf32>
    %138 = vector.broadcast %136 : vector<1x256xf32> to vector<16x256xf32>
    %139 = arith.mulf %137, %138 : vector<16x256xf32>
    %140 = arith.addf %134, %139 : vector<16x256xf32>
    %141 = vector.extract_strided_slice %69 {offsets = [0, 12], sizes = [16, 1], strides = [1, 1]} : vector<16x16xf32> to vector<16x1xf32>
    %142 = vector.extract_strided_slice %68 {offsets = [12, 0], sizes = [1, 256], strides = [1, 1]} : vector<16x256xf32> to vector<1x256xf32>
    %143 = vector.broadcast %141 : vector<16x1xf32> to vector<16x256xf32>
    %144 = vector.broadcast %142 : vector<1x256xf32> to vector<16x256xf32>
    %145 = arith.mulf %143, %144 : vector<16x256xf32>
    %146 = arith.addf %140, %145 : vector<16x256xf32>
    %147 = vector.extract_strided_slice %69 {offsets = [0, 13], sizes = [16, 1], strides = [1, 1]} : vector<16x16xf32> to vector<16x1xf32>
    %148 = vector.extract_strided_slice %68 {offsets = [13, 0], sizes = [1, 256], strides = [1, 1]} : vector<16x256xf32> to vector<1x256xf32>
    %149 = vector.broadcast %147 : vector<16x1xf32> to vector<16x256xf32>
    %150 = vector.broadcast %148 : vector<1x256xf32> to vector<16x256xf32>
    %151 = arith.mulf %149, %150 : vector<16x256xf32>
    %152 = arith.addf %146, %151 : vector<16x256xf32>
    %153 = vector.extract_strided_slice %69 {offsets = [0, 14], sizes = [16, 1], strides = [1, 1]} : vector<16x16xf32> to vector<16x1xf32>
    %154 = vector.extract_strided_slice %68 {offsets = [14, 0], sizes = [1, 256], strides = [1, 1]} : vector<16x256xf32> to vector<1x256xf32>
    %155 = vector.broadcast %153 : vector<16x1xf32> to vector<16x256xf32>
    %156 = vector.broadcast %154 : vector<1x256xf32> to vector<16x256xf32>
    %157 = arith.mulf %155, %156 : vector<16x256xf32>
    %158 = arith.addf %152, %157 : vector<16x256xf32>
    %159 = vector.extract_strided_slice %69 {offsets = [0, 15], sizes = [16, 1], strides = [1, 1]} : vector<16x16xf32> to vector<16x1xf32>
    %160 = vector.extract_strided_slice %68 {offsets = [15, 0], sizes = [1, 256], strides = [1, 1]} : vector<16x256xf32> to vector<1x256xf32>
    %161 = vector.broadcast %159 : vector<16x1xf32> to vector<16x256xf32>
    %162 = vector.broadcast %160 : vector<1x256xf32> to vector<16x256xf32>
    %163 = arith.mulf %161, %162 : vector<16x256xf32>
    %164 = arith.addf %158, %163 : vector<16x256xf32>
    %c0_47 = arith.constant 0 : index
    %c0_48 = arith.constant 0 : index
    %165 = vector.load %arg10[%c0_47, %c0_48] : memref<16x1xf32, #tpu.memory_space<vmem>>, vector<16x1xf32>
    %166 = vector.broadcast %165 : vector<16x1xf32> to vector<16x256xf32>
    %167 = arith.addf %164, %166 : vector<16x256xf32>
    %cst_49 = arith.constant 5.000000e-01 : f32
    %168 = vector.broadcast %cst_49 : f32 to vector<16x256xf32>
    %169 = arith.mulf %168, %167 : vector<16x256xf32>
    %170 = math.tanh %169 : vector<16x256xf32>
    %cst_50 = arith.constant 1.000000e+00 : f32
    %171 = vector.broadcast %cst_50 : f32 to vector<16x256xf32>
    %172 = arith.addf %170, %171 : vector<16x256xf32>
    %cst_51 = arith.constant 5.000000e-01 : f32
    %173 = vector.broadcast %cst_51 : f32 to vector<16x256xf32>
    %174 = arith.mulf %173, %172 : vector<16x256xf32>
    %c0_52 = arith.constant 0 : index
    %c0_53 = arith.constant 0 : index
    %c0_54 = arith.constant 0 : index
    %c0_55 = arith.constant 0 : index
    %175 = vector.load %arg11[%c0_52, %c0_53, %c0_54, %c0_55] : memref<1x1x16x256xf32, #tpu.memory_space<vmem>>, vector<1x1x16x256xf32>
    %176 = vector.shape_cast %175 : vector<1x1x16x256xf32> to vector<16x256xf32>
    %177 = vector.shape_cast %174 : vector<16x256xf32> to vector<1x1x16x256xf32>
    tpu.vector_store %arg11[%c0_52, %c0_53, %c0_54, %c0_55], %177 {strides = array<i32>} : memref<1x1x16x256xf32, #tpu.memory_space<vmem>>, vector<1x1x16x256xf32>,
    return
  }
  func.func @transform_0(%arg0: i32, %arg1: i32) -> (i32, i32, i32, i32) {
    %c0_i32 = arith.constant 0 : i32
    %c0_i32_0 = arith.constant 0 : i32
    %c0_i32_1 = arith.constant 0 : i32
    return %arg0, %arg1, %c0_i32, %c0_i32_0 : i32, i32, i32, i32
  }
  func.func @transform_1(%arg0: i32, %arg1: i32) -> (i32, i32) {
    %c0_i32 = arith.constant 0 : i32
    %c0_i32_0 = arith.constant 0 : i32
    %c0_i32_1 = arith.constant 0 : i32
    return %c0_i32, %c0_i32_0 : i32, i32
  }
  func.func @transform_2(%arg0: i32, %arg1: i32) -> (i32, i32) {
    %c0_i32 = arith.constant 0 : i32
    %c0_i32_0 = arith.constant 0 : i32
    %c0_i32_1 = arith.constant 0 : i32
    return %c0_i32, %c0_i32_0 : i32, i32
  }
  func.func @transform_3(%arg0: i32, %arg1: i32) -> (i32, i32) {
    %c0_i32 = arith.constant 0 : i32
    %c0_i32_0 = arith.constant 0 : i32
    %c0_i32_1 = arith.constant 0 : i32
    return %c0_i32, %c0_i32_0 : i32, i32
  }
  func.func @transform_4(%arg0: i32, %arg1: i32) -> (i32, i32) {
    %c0_i32 = arith.constant 0 : i32
    %c0_i32_0 = arith.constant 0 : i32
    %c0_i32_1 = arith.constant 0 : i32
    return %c0_i32, %c0_i32_0 : i32, i32
  }
  func.func @transform_5(%arg0: i32, %arg1: i32) -> (i32, i32) {
    %c0_i32 = arith.constant 0 : i32
    %c0_i32_0 = arith.constant 0 : i32
    %c0_i32_1 = arith.constant 0 : i32
    return %c0_i32, %c0_i32_0 : i32, i32
  }
  func.func @transform_6(%arg0: i32, %arg1: i32) -> (i32, i32) {
    %c0_i32 = arith.constant 0 : i32
    %c0_i32_0 = arith.constant 0 : i32
    %c0_i32_1 = arith.constant 0 : i32
    return %c0_i32, %c0_i32_0 : i32, i32
  }
  func.func @transform_7(%arg0: i32, %arg1: i32) -> (i32, i32) {
    %c0_i32 = arith.constant 0 : i32
    %c0_i32_0 = arith.constant 0 : i32
    %c0_i32_1 = arith.constant 0 : i32
    return %c0_i32, %c0_i32_0 : i32, i32
  }
  func.func @transform_8(%arg0: i32, %arg1: i32) -> (i32, i32) {
    %c0_i32 = arith.constant 0 : i32
    %c0_i32_0 = arith.constant 0 : i32
    %c0_i32_1 = arith.constant 0 : i32
    return %c0_i32, %c0_i32_0 : i32, i32
  }
  func.func @transform_9(%arg0: i32, %arg1: i32) -> (i32, i32, i32, i32) {
    %c0_i32 = arith.constant 0 : i32
    %c0_i32_0 = arith.constant 0 : i32
    %c0_i32_1 = arith.constant 0 : i32
    return %arg0, %arg1, %c0_i32, %c0_i32_0 : i32, i32, i32, i32
  }
}

</mosaic_0001>

<llo_original>
// kernel: tpu_custom_call.1
$region0: #{tpu_custom_call.1}
  #allocation0 [shape = 'u32[]', space=smem, size = 0x4, offset = 0x4, fixed_abs, tag = 'smem constant byte address 0x4 - core index']
  #allocation1 [shape = 'u32[144,128]{1,0:T(1,128)}', space=vmem, size = 0x12000, scoped, tag = 'internal scratch']
  %s0 = inlined_call_operand.hbm [shape: bf16[2,2,16,294], index: 0, kind: input, shape index: {}]
  %s1 = inlined_call_operand.vmem [shape: bf16[4,144], index: 1, kind: input, shape index: {}]
  %s2 = inlined_call_operand.vmem [shape: f32[4,1], index: 2, kind: input, shape index: {}]
  %s3 = inlined_call_operand.vmem [shape: f32[4,1], index: 3, kind: input, shape index: {}]
  %s4 = inlined_call_operand.vmem [shape: f32[16,4], index: 4, kind: input, shape index: {}]
  %s5 = inlined_call_operand.vmem [shape: f32[16,1], index: 5, kind: input, shape index: {}]
  %s6 = inlined_call_operand.vmem [shape: f32[16,1], index: 6, kind: input, shape index: {}]
  %s7 = inlined_call_operand.vmem [shape: f32[16,16], index: 7, kind: input, shape index: {}]
  %s8 = inlined_call_operand.vmem [shape: f32[16,1], index: 8, kind: input, shape index: {}]
  %s9 = inlined_call_operand.hbm [shape: f32[2,2,16,256], index: 9, kind: output, shape index: {}]
  %s10 = sld [smem:[#allocation0]]
  $region73: #{tpu_custom_call.1} parent=0
    _
  %s12 = ssub.s32 1, %s10
  %s13 = scalar_select 0, %s12, %s10
  $region1: #{tpu_custom_call.1} parent=0
    #allocation2 [shape = 'u8[24576]{0}', space=vmem, size = 0x6000, scoped, tag = 'input window, operand 0']
    #allocation3 [shape = 's32[2]{0}', space=sflag, size = 0x8, scoped, tag = 'scoped memory for tpu_custom_call.1']
    #allocation4 [shape = 's32[2]{0}', space=sflag, size = 0x8, scoped, tag = 'scoped memory for tpu_custom_call.1']
    #allocation5 [shape = 'u8[32768]{0}', space=vmem, size = 0x8000, scoped, tag = 'output window, operand 0']
    %14 = vsyncpa [#allocation3], 0
    %s15 = scalar_lea.sflag [#allocation3], 1
    %16 = vsyncpa %s15, 0
    %17 = vsyncpa [#allocation4], 0
    %s18 = scalar_lea.sflag [#allocation4], 1
    %19 = vsyncpa %s18, 0
    loop: start=0, step=1, limit=6
    $region2: #{tpu_custom_call.1} parent=1 // loop_pre_header
      _
    $region3: #{tpu_custom_call.1} parent=1 // loop_header
      %s21 = sphi 0, %s25
      %p22 = scmp.ge.s32.totalorder %s21, 6
      %s28 = sphi 0, %s40
      %s29 = sphi 0, %s36
      %s30 = sphi 0, %s28
      %s31 = sphi 0, %s29
      %s32 = sphi 0, %s30
      %s33 = sphi 0, %s31
      %s45 = sphi 0, %s47
      %s48 = sphi 0, %s45
      %s49 = sphi 0, %s48
      %s65 = sphi 0, %s49
      %s69 = sphi 0, %s69
      %s71 = sphi 0, %s69
      %s72 = sphi 0, %s71
      %s86 = sphi 0, %s72
      %s90 = sphi 0, %s90
      %s92 = sphi 0, %s90
      %s93 = sphi 0, %s92
      %s107 = sphi 0, %s93
      %s111 = sphi 0, %s111
      %s113 = sphi 0, %s111
      %s114 = sphi 0, %s113
      %s128 = sphi 0, %s114
      %s132 = sphi 0, %s132
      %s134 = sphi 0, %s132
      %s135 = sphi 0, %s134
      %s149 = sphi 0, %s135
      %s153 = sphi 0, %s153
      %s155 = sphi 0, %s153
      %s156 = sphi 0, %s155
      %s170 = sphi 0, %s156
      %s174 = sphi 0, %s174
      %s176 = sphi 0, %s174
      %s177 = sphi 0, %s176
      %s191 = sphi 0, %s177
      %s195 = sphi 0, %s195
      %s197 = sphi 0, %s195
      %s198 = sphi 0, %s197
      %s212 = sphi 0, %s198
      %s216 = sphi 0, %s216
      %s218 = sphi 0, %s216
      %s219 = sphi 0, %s218
      %s233 = sphi 0, %s219
      %s241 = sphi 0, %s243
      %s244 = sphi 0, %s241
      %s245 = sphi 0, %s244
      %s261 = sphi 0, %s245
    $region4: #{tpu_custom_call.1} parent=1 // loop_header_branch
      %24 = sbr.rel (%p22) target = $region8
    $region5: #{tpu_custom_call.1} parent=1 // loop_body
      %s26 = ssub.s32 %s21, 1
      %s27 = ssub.s32 %s21, 2
      %s34 = sadd.s32 1, %s29
      %p35 = scmp.ge.s32.totalorder %s34, 2
      %s36 = scalar_select %p35, 0, %s34
      %s37 = sadd.s32 1, %s28
      %s38 = scalar_select %p35, %s37, %s28
      %p39 = scmp.ge.s32.totalorder %s38, 2
      %s40 = scalar_select %p39, 0, %s38
      %s41 = ssub.s32 %s28, %s40
      %s42 = ssub.s32 %s29, %s36
      %s43 = sor.u32 %s41, %s42
      %p44 = scmp.eq.s32.totalorder %s43, 0
      %s46 = sadd.s32 %s45, 1
      %s47 = scalar_select %p44, %s45, %s46
      %p50 = pneg %p44
      %p51 = scmp.eq.s32.totalorder %s21, 3
      %p52 = por %p50, %p51
      %p53 = scmp.ne.s32.totalorder %s45, %s48
      %p54 = scmp.eq.s32.totalorder %s21, 0
      %p55 = por %p53, %p54
      %p56 = scmp.ne.s32.totalorder %s45, %s48
      %p57 = scmp.eq.s32.totalorder %s26, 3
      %p58 = por %p56, %p57
      %p59 = scmp.ne.s32.totalorder %s48, %s49
      %p60 = scmp.eq.s32.totalorder %s26, 0
      %p61 = por %p59, %p60
      %p62 = scmp.ne.s32.totalorder %s48, %s49
      %p63 = scmp.eq.s32.totalorder %s27, 3
      %p64 = por %p62, %p63
      %p66 = scmp.ne.s32.totalorder %s49, %s65
      %p67 = scmp.eq.s32.totalorder %s27, 0
      %p68 = por %p66, %p67
      %s70 = sadd.s32 %s69, 1
      %p73 = scmp.eq.s32.totalorder %s21, 3
      %p74 = scmp.ne.s32.totalorder %s69, %s71
      %p75 = scmp.eq.s32.totalorder %s21, 0
      %p76 = por %p74, %p75
      %p77 = scmp.ne.s32.totalorder %s69, %s71
      %p78 = scmp.eq.s32.totalorder %s26, 3
      %p79 = por %p77, %p78
      %p80 = scmp.ne.s32.totalorder %s71, %s72
      %p81 = scmp.eq.s32.totalorder %s26, 0
      %p82 = por %p80, %p81
      %p83 = scmp.ne.s32.totalorder %s71, %s72
      %p84 = scmp.eq.s32.totalorder %s27, 3
      %p85 = por %p83, %p84
      %p87 = scmp.ne.s32.totalorder %s72, %s86
      %p88 = scmp.eq.s32.totalorder %s27, 0
      %p89 = por %p87, %p88
      %s91 = sadd.s32 %s90, 1
      %p94 = scmp.eq.s32.totalorder %s21, 3
      %p95 = scmp.ne.s32.totalorder %s90, %s92
      %p96 = scmp.eq.s32.totalorder %s21, 0
      %p97 = por %p95, %p96
      %p98 = scmp.ne.s32.totalorder %s90, %s92
      %p99 = scmp.eq.s32.totalorder %s26, 3
      %p100 = por %p98, %p99
      %p101 = scmp.ne.s32.totalorder %s92, %s93
      %p102 = scmp.eq.s32.totalorder %s26, 0
      %p103 = por %p101, %p102
      %p104 = scmp.ne.s32.totalorder %s92, %s93
      %p105 = scmp.eq.s32.totalorder %s27, 3
      %p106 = por %p104, %p105
      %p108 = scmp.ne.s32.totalorder %s93, %s107
      %p109 = scmp.eq.s32.totalorder %s27, 0
      %p110 = por %p108, %p109
      %s112 = sadd.s32 %s111, 1
      %p115 = scmp.eq.s32.totalorder %s21, 3
      %p116 = scmp.ne.s32.totalorder %s111, %s113
      %p117 = scmp.eq.s32.totalorder %s21, 0
      %p118 = por %p116, %p117
      %p119 = scmp.ne.s32.totalorder %s111, %s113
      %p120 = scmp.eq.s32.totalorder %s26, 3
      %p121 = por %p119, %p120
      %p122 = scmp.ne.s32.totalorder %s113, %s114
      %p123 = scmp.eq.s32.totalorder %s26, 0
      %p124 = por %p122, %p123
      %p125 = scmp.ne.s32.totalorder %s113, %s114
      %p126 = scmp.eq.s32.totalorder %s27, 3
      %p127 = por %p125, %p126
      %p129 = scmp.ne.s32.totalorder %s114, %s128
      %p130 = scmp.eq.s32.totalorder %s27, 0
      %p131 = por %p129, %p130
      %s133 = sadd.s32 %s132, 1
      %p136 = scmp.eq.s32.totalorder %s21, 3
      %p137 = scmp.ne.s32.totalorder %s132, %s134
      %p138 = scmp.eq.s32.totalorder %s21, 0
      %p139 = por %p137, %p138
      %p140 = scmp.ne.s32.totalorder %s132, %s134
      %p141 = scmp.eq.s32.totalorder %s26, 3
      %p142 = por %p140, %p141
      %p143 = scmp.ne.s32.totalorder %s134, %s135
      %p144 = scmp.eq.s32.totalorder %s26, 0
      %p145 = por %p143, %p144
      %p146 = scmp.ne.s32.totalorder %s134, %s135
      %p147 = scmp.eq.s32.totalorder %s27, 3
      %p148 = por %p146, %p147
      %p150 = scmp.ne.s32.totalorder %s135, %s149
      %p151 = scmp.eq.s32.totalorder %s27, 0
      %p152 = por %p150, %p151
      %s154 = sadd.s32 %s153, 1
      %p157 = scmp.eq.s32.totalorder %s21, 3
      %p158 = scmp.ne.s32.totalorder %s153, %s155
      %p159 = scmp.eq.s32.totalorder %s21, 0
      %p160 = por %p158, %p159
      %p161 = scmp.ne.s32.totalorder %s153, %s155
      %p162 = scmp.eq.s32.totalorder %s26, 3
      %p163 = por %p161, %p162
      %p164 = scmp.ne.s32.totalorder %s155, %s156
      %p165 = scmp.eq.s32.totalorder %s26, 0
      %p166 = por %p164, %p165
      %p167 = scmp.ne.s32.totalorder %s155, %s156
      %p168 = scmp.eq.s32.totalorder %s27, 3
      %p169 = por %p167, %p168
      %p171 = scmp.ne.s32.totalorder %s156, %s170
      %p172 = scmp.eq.s32.totalorder %s27, 0
      %p173 = por %p171, %p172
      %s175 = sadd.s32 %s174, 1
      %p178 = scmp.eq.s32.totalorder %s21, 3
      %p179 = scmp.ne.s32.totalorder %s174, %s176
      %p180 = scmp.eq.s32.totalorder %s21, 0
      %p181 = por %p179, %p180
      %p182 = scmp.ne.s32.totalorder %s174, %s176
      %p183 = scmp.eq.s32.totalorder %s26, 3
      %p184 = por %p182, %p183
      %p185 = scmp.ne.s32.totalorder %s176, %s177
      %p186 = scmp.eq.s32.totalorder %s26, 0
      %p187 = por %p185, %p186
      %p188 = scmp.ne.s32.totalorder %s176, %s177
      %p189 = scmp.eq.s32.totalorder %s27, 3
      %p190 = por %p188, %p189
      %p192 = scmp.ne.s32.totalorder %s177, %s191
      %p193 = scmp.eq.s32.totalorder %s27, 0
      %p194 = por %p192, %p193
      %s196 = sadd.s32 %s195, 1
      %p199 = scmp.eq.s32.totalorder %s21, 3
      %p200 = scmp.ne.s32.totalorder %s195, %s197
      %p201 = scmp.eq.s32.totalorder %s21, 0
      %p202 = por %p200, %p201
      %p203 = scmp.ne.s32.totalorder %s195, %s197
      %p204 = scmp.eq.s32.totalorder %s26, 3
      %p205 = por %p203, %p204
      %p206 = scmp.ne.s32.totalorder %s197, %s198
      %p207 = scmp.eq.s32.totalorder %s26, 0
      %p208 = por %p206, %p207
      %p209 = scmp.ne.s32.totalorder %s197, %s198
      %p210 = scmp.eq.s32.totalorder %s27, 3
      %p211 = por %p209, %p210
      %p213 = scmp.ne.s32.totalorder %s198, %s212
      %p214 = scmp.eq.s32.totalorder %s27, 0
      %p215 = por %p213, %p214
      %s217 = sadd.s32 %s216, 1
      %p220 = scmp.eq.s32.totalorder %s21, 3
      %p221 = scmp.ne.s32.totalorder %s216, %s218
      %p222 = scmp.eq.s32.totalorder %s21, 0
      %p223 = por %p221, %p222
      %p224 = scmp.ne.s32.totalorder %s216, %s218
      %p225 = scmp.eq.s32.totalorder %s26, 3
      %p226 = por %p224, %p225
      %p227 = scmp.ne.s32.totalorder %s218, %s219
      %p228 = scmp.eq.s32.totalorder %s26, 0
      %p229 = por %p227, %p228
      %p230 = scmp.ne.s32.totalorder %s218, %s219
      %p231 = scmp.eq.s32.totalorder %s27, 3
      %p232 = por %p230, %p231
      %p234 = scmp.ne.s32.totalorder %s219, %s233
      %p235 = scmp.eq.s32.totalorder %s27, 0
      %p236 = por %p234, %p235
      %s237 = ssub.s32 %s28, %s40
      %s238 = ssub.s32 %s29, %s36
      %s239 = sor.u32 %s237, %s238
      %p240 = scmp.eq.s32.totalorder %s239, 0
      %s242 = sadd.s32 %s241, 1
      %s243 = scalar_select %p240, %s241, %s242
      %p246 = pneg %p240
      %p247 = scmp.eq.s32.totalorder %s21, 3
      %p248 = por %p246, %p247
      %p249 = scmp.ne.s32.totalorder %s241, %s244
      %p250 = scmp.eq.s32.totalorder %s21, 0
      %p251 = por %p249, %p250
      %p252 = scmp.ne.s32.totalorder %s241, %s244
      %p253 = scmp.eq.s32.totalorder %s26, 3
      %p254 = por %p252, %p253
      %p255 = scmp.ne.s32.totalorder %s244, %s245
      %p256 = scmp.eq.s32.totalorder %s26, 0
      %p257 = por %p255, %p256
      %p258 = scmp.ne.s32.totalorder %s244, %s245
      %p259 = scmp.eq.s32.totalorder %s27, 3
      %p260 = por %p258, %p259
      %p262 = scmp.ne.s32.totalorder %s245, %s261
      %p263 = scmp.eq.s32.totalorder %s27, 0
      %p264 = por %p262, %p263
      %p265 = scmp.le.s32.totalorder 1, %s21
      %p266 = scmp.lt.s32.totalorder %s21, 5
      %p267 = pnand %p265, %p266
      %p268 = pneg %p267
      // Predicated region
      $region9: #{tpu_custom_call.1} parent=5 // pred_check
        _
      $region10: #{tpu_custom_call.1} parent=5 // pred_check_branch
        %270 = sbr.rel (%p267) target = $region12
      $region11: #{tpu_custom_call.1} parent=5 // pred_region
        %s271 = ssub.s32 %s21, 1
        // Predicated region
        $region13: #{tpu_custom_call.1} parent=11 // pred_check
          %p272 = pneg %p82
        $region14: #{tpu_custom_call.1} parent=11 // pred_check_branch
          %274 = sbr.rel (%p272) target = $region16
        $region15: #{tpu_custom_call.1} parent=11 // pred_region
          _
        $region16: #{tpu_custom_call.1} parent=11 // pred_fallthru
          _
        // Predicated region
        $region17: #{tpu_custom_call.1} parent=11 // pred_check
          %p275 = pneg %p103
        $region18: #{tpu_custom_call.1} parent=11 // pred_check_branch
          %277 = sbr.rel (%p275) target = $region20
        $region19: #{tpu_custom_call.1} parent=11 // pred_region
          _
        $region20: #{tpu_custom_call.1} parent=11 // pred_fallthru
          _
        // Predicated region
        $region21: #{tpu_custom_call.1} parent=11 // pred_check
          %p278 = pneg %p124
        $region22: #{tpu_custom_call.1} parent=11 // pred_check_branch
          %280 = sbr.rel (%p278) target = $region24
        $region23: #{tpu_custom_call.1} parent=11 // pred_region
          _
        $region24: #{tpu_custom_call.1} parent=11 // pred_fallthru
          _
        // Predicated region
        $region25: #{tpu_custom_call.1} parent=11 // pred_check
          %p281 = pneg %p145
        $region26: #{tpu_custom_call.1} parent=11 // pred_check_branch
          %283 = sbr.rel (%p281) target = $region28
        $region27: #{tpu_custom_call.1} parent=11 // pred_region
          _
        $region28: #{tpu_custom_call.1} parent=11 // pred_fallthru
          _
        // Predicated region
        $region29: #{tpu_custom_call.1} parent=11 // pred_check
          %p284 = pneg %p166
        $region30: #{tpu_custom_call.1} parent=11 // pred_check_branch
          %286 = sbr.rel (%p284) target = $region32
        $region31: #{tpu_custom_call.1} parent=11 // pred_region
          _
        $region32: #{tpu_custom_call.1} parent=11 // pred_fallthru
          _
        // Predicated region
        $region33: #{tpu_custom_call.1} parent=11 // pred_check
          %p287 = pneg %p187
        $region34: #{tpu_custom_call.1} parent=11 // pred_check_branch
          %289 = sbr.rel (%p287) target = $region36
        $region35: #{tpu_custom_call.1} parent=11 // pred_region
          _
        $region36: #{tpu_custom_call.1} parent=11 // pred_fallthru
          _
        // Predicated region
        $region37: #{tpu_custom_call.1} parent=11 // pred_check
          %p290 = pneg %p208
        $region38: #{tpu_custom_call.1} parent=11 // pred_check_branch
          %292 = sbr.rel (%p290) target = $region40
        $region39: #{tpu_custom_call.1} parent=11 // pred_region
          _
        $region40: #{tpu_custom_call.1} parent=11 // pred_fallthru
          _
        // Predicated region
        $region41: #{tpu_custom_call.1} parent=11 // pred_check
          %p293 = pneg %p229
        $region42: #{tpu_custom_call.1} parent=11 // pred_check_branch
          %295 = sbr.rel (%p293) target = $region44
        $region43: #{tpu_custom_call.1} parent=11 // pred_region
          _
        $region44: #{tpu_custom_call.1} parent=11 // pred_fallthru
          _
      $region12: #{tpu_custom_call.1} parent=5 // pred_fallthru
        _
      %p296 = scmp.lt.s32.totalorder %s21, 4
      // Predicated region
      $region45: #{tpu_custom_call.1} parent=5 // pred_check
        %p297 = pneg %p296
      $region46: #{tpu_custom_call.1} parent=5 // pred_check_branch
        %299 = sbr.rel (%p297) target = $region48
      $region47: #{tpu_custom_call.1} parent=5 // pred_region
        // Predicated region
        $region49: #{tpu_custom_call.1} parent=47 // pred_check
          %p300 = pneg %p55
        $region50: #{tpu_custom_call.1} parent=47 // pred_check_branch
          %302 = sbr.rel (%p300) target = $region52
        $region51: #{tpu_custom_call.1} parent=47 // pred_region
          %s303 = sand.u32 %s45, 1
          %s304 = scalar_lea.sflag [#allocation3], %s303
          %s305 = sand.u32 %s45, 1
          %s306 = smul.addr %s305, 24
          %s307 = scalar_lea.vmem [#allocation2], %s306
          %s309 = ssub.s32 384, 384
          %310 = vsyncadd %s304, %s309
          %s311 = smul.addr %s29, 6
          %s312 = smul.addr %s28, 12
          %s313 = sadd.s32 %s311, %s312
          %s314 = smul.addr %s313, 64
          %s315 = scalar_lea.hbm %s0, %s314
          %s316 = sshll.u32 %s307, 4
          %s317 = int_to_ptr.vmem [resolvable:$true] %s316
          %322 = dma.hbm_to_vmem [thread:$0]  %s315, 384, %s317, %s304, 192, 192, 12
        $region52: #{tpu_custom_call.1} parent=47 // pred_fallthru
          _
      $region48: #{tpu_custom_call.1} parent=5 // pred_fallthru
        _
      %p323 = scmp.le.s32.totalorder 1, %s21
      %p324 = scmp.lt.s32.totalorder %s21, 5
      %p325 = pnand %p323, %p324
      %p326 = pneg %p325
      // Predicated region
      $region53: #{tpu_custom_call.1} parent=5 // pred_check
        _
      $region54: #{tpu_custom_call.1} parent=5 // pred_check_branch
        %328 = sbr.rel (%p325) target = $region56
      $region55: #{tpu_custom_call.1} parent=5 // pred_region
        %s329 = ssub.s32 %s21, 1
        %s330 = sand.u32 %s48, 1
        %s331 = scalar_lea.sflag [#allocation3], %s330
        %s332 = sand.u32 %s48, 1
        %s333 = smul.addr %s332, 24
        %s334 = scalar_lea.vmem [#allocation2], %s333
        // Predicated region
        $region57: #{tpu_custom_call.1} parent=55 // pred_check
          %p335 = pneg %p61
        $region58: #{tpu_custom_call.1} parent=55 // pred_check_branch
          %337 = sbr.rel (%p335) target = $region60
        $region59: #{tpu_custom_call.1} parent=55 // pred_region
          %338 = dma.done %s331, 384
        $region60: #{tpu_custom_call.1} parent=55 // pred_fallthru
          _
        %s339 = sand.u32 %s48, 1
        %s340 = scalar_lea.sflag [#allocation3], %s339
        %s341 = sand.u32 %s48, 1
        %s342 = smul.addr %s341, 24
        %s343 = scalar_lea.vmem [#allocation2], %s342
        %p344 = pneg %p61
        %p345 = pneg %p58
        %p346 = pneg %p82
        %p347 = pneg %p79
        %p348 = pneg %p103
        %p349 = pneg %p100
        %p350 = pneg %p124
        %p351 = pneg %p121
        %p352 = pneg %p145
        %p353 = pneg %p142
        %p354 = pneg %p166
        %p355 = pneg %p163
        %p356 = pneg %p187
        %p357 = pneg %p184
        %p358 = pneg %p208
        %p359 = pneg %p205
        %p360 = pneg %p229
        %p361 = pneg %p226
        %p362 = pneg %p257
        %p363 = pneg %p254
        %s364 = sand.u32 %s244, 1
        %s365 = scalar_lea.sflag [#allocation4], %s364
        %s366 = sand.u32 %s244, 1
        %s367 = smul.addr %s366, 32
        %s368 = scalar_lea.vmem [#allocation5], %s367
        %v370 = vld [vmem:[%s334] sm:$0xff]
        %v371 = vld [vmem:[%s334 + $0xc] sm:$0xff]
        %v372 = vld [vmem:[%s334 + $0x8] sm:$0xf]
        %v373 = vld [vmem:[%s334 + $0x14] sm:$0xf]
        %v376 = vunpack.c.l.b16 %v370
        %v377 = vunpack.c.h.b16 %v370
        %v378 = vunpack.c.l.b16 %v371
        %v379 = vunpack.c.h.b16 %v371
        %v380 = vpack.c.b16 %v378, %v376
        %v381 = vpack.c.b16 %v379, %v377
        %v386 = vunpack.c.l.b16 %v372
        %v387 = vunpack.c.l.b16 %v373
        %v388 = vpack.c.b16 %v387, %v386
        %389 = vrot.lane.b32.xlu0 %v380, 127
        %v390 = vpop.permute.xlu0 %389
        %391 = vrot.lane.b32.xlu0 %v381, 127
        %v392 = vpop.permute.xlu0 %391
        %393 = vrot.lane.b32.xlu0 %v388, 127
        %v394 = vpop.permute.xlu0 %393
        %vm395 = vcmask 1039360
        %v396 = vsel %vm395, %v390, %v392
        %v397 = vsel %vm395, %v392, %v394
        %400 = vrot.lane.b32.xlu0 %v380, 126
        %v401 = vpop.permute.xlu0 %400
        %402 = vrot.lane.b32.xlu0 %v381, 126
        %v403 = vpop.permute.xlu0 %402
        %404 = vrot.lane.b32.xlu0 %v388, 126
        %v405 = vpop.permute.xlu0 %404
        %vm406 = vcmask 1031168
        %v407 = vsel %vm406, %v401, %v403
        %v408 = vsel %vm406, %v403, %v405
        %v411 = vld [vmem:[%s1] sm:$0x3]
        %v414 = vunpack.c.l.s4 1983009808
        %v415 = vunpack.c.0.s8 %v414
        %v416 = vlaneseq
        %v417 = vshrl.u32 %v416, 7
        %v418 = vsub.s32 %v415, %v417
        %v419 = vrot.slane %v411, %v418
        %420 = vrot.lane.b32.xlu0 %v419, 80
        %v421 = vpop.permute.xlu0 %420
        %422 = vrot.lane.b32.xlu0 %v380, 110
        %v423 = vpop.permute.xlu0 %422
        %424 = vrot.lane.b32.xlu0 %v381, 110
        %v425 = vpop.permute.xlu0 %424
        %426 = vrot.lane.b32.xlu0 %v388, 110
        %v427 = vpop.permute.xlu0 %426
        %428 = vrot.lane.b32.xlu0 %v396, 110
        %v429 = vpop.permute.xlu0 %428
        %430 = vrot.lane.b32.xlu0 %v397, 110
        %v431 = vpop.permute.xlu0 %430
        %432 = vrot.lane.b32.xlu0 %v394, 110
        %v433 = vpop.permute.xlu0 %432
        %434 = vrot.lane.b32.xlu0 %v407, 110
        %v435 = vpop.permute.xlu0 %434
        %436 = vrot.lane.b32.xlu0 %v408, 110
        %v437 = vpop.permute.xlu0 %436
        %438 = vrot.lane.b32.xlu0 %v405, 110
        %v439 = vpop.permute.xlu0 %438
        %vm440 = vcmask 900096
        %v441 = vsel %vm440, %v423, %v425
        %v442 = vsel %vm440, %v425, %v427
        %v443 = vsel %vm440, %v429, %v431
        %v444 = vsel %vm440, %v431, %v433
        %v445 = vsel %vm440, %v435, %v437
        %v446 = vsel %vm440, %v437, %v439
        %vm453 = vcmask 392192
        %v455 = vsel %vm453, %v421, 0
        %457 = vmatprep.subr.bf16.mxu0 %v442
        %458 = vmatpush1.bf16.msra.mxu0 %v441
        %459 = vmatprep.subr.bf16.mxu0 %v444
        %460 = vmatpush1.bf16.msra.mxu0 %v443
        %461 = vmatprep.subr.bf16.mxu0 %v446
        %462 = vmatpush1.bf16.msra.mxu0 %v445
        %463 = vmatprep.subr.bf16.mxu0 0
        %464 = vmatpush1.bf16.msra.mxu0 0
        %465 = vmatprep.subr.bf16.mxu0 0
        %466 = vmatpush1.bf16.msra.mxu0 0
        %467 = vmatprep.subr.bf16.mxu0 0
        %468 = vmatpush1.bf16.msra.mxu0 0
        %469 = vmatprep.subr.bf16.mxu0 0
        %470 = vmatpush1.bf16.msra.mxu0 0
        %471 = vmatprep.subr.bf16.mxu0 0
        %472 = vmatpush1.bf16.msra.mxu0 0
        %473 = vmatprep.subr.bf16.mxu0 0
        %474 = vmatpush1.bf16.msra.mxu0 0
        %475 = vmatprep.subr.bf16.mxu0 0
        %476 = vmatpush1.bf16.msra.mxu0 0
        %477 = vmatprep.subr.bf16.mxu0 0
        %478 = vmatpush1.bf16.msra.mxu0 0
        %479 = vmatprep.subr.bf16.mxu0 0
        %480 = vmatpush1.bf16.msra.mxu0 0
        %481 = vmatprep.subr.bf16.mxu0 0
        %482 = vmatpush1.bf16.msra.mxu0 0
        %483 = vmatprep.subr.bf16.mxu0 0
        %484 = vmatpush1.bf16.msra.mxu0 0
        %485 = vmatprep.subr.bf16.mxu0 0
        %486 = vmatpush1.bf16.msra.mxu0 0
        %487 = vmatprep.subr.bf16.mxu0 0
        %488 = vmatpush1.bf16.msra.mxu0 0
        %489 = vmatprep.mubr.bf16.mxu0 0
        %490 = vmatmul.mubr.bf16.gmra.mrb[0].mxu0 %v455
        %v491 = vpop.f32.mrb[0].mxu0
        %v492 = vadd.f32 0.0, %v491
        %v493 = vpop.f32.mrb[0].mxu0
        %v494 = vadd.f32 0.0, %v493
        %v495 = vpop.f32.mrb[0].mxu0
        %v496 = vpop.f32.mrb[0].mxu0
        %497 = vdwg.mxu0
        %v499 = vsel %vm453, %v411, 0
        %501 = vmatprep.subr.bf16.mxu0 %v381
        %502 = vmatpush1.bf16.msra.mxu0 %v380
        %503 = vmatprep.subr.bf16.mxu0 %v397
        %504 = vmatpush1.bf16.msra.mxu0 %v396
        %505 = vmatprep.subr.bf16.mxu0 %v408
        %506 = vmatpush1.bf16.msra.mxu0 %v407
        %507 = vmatprep.subr.bf16.mxu0 0
        %508 = vmatpush1.bf16.msra.mxu0 0
        %509 = vmatprep.subr.bf16.mxu0 0
        %510 = vmatpush1.bf16.msra.mxu0 0
        %511 = vmatprep.subr.bf16.mxu0 0
        %512 = vmatpush1.bf16.msra.mxu0 0
        %513 = vmatprep.subr.bf16.mxu0 0
        %514 = vmatpush1.bf16.msra.mxu0 0
        %515 = vmatprep.subr.bf16.mxu0 0
        %516 = vmatpush1.bf16.msra.mxu0 0
        %517 = vmatprep.subr.bf16.mxu0 0
        %518 = vmatpush1.bf16.msra.mxu0 0
        %519 = vmatprep.subr.bf16.mxu0 0
        %520 = vmatpush1.bf16.msra.mxu0 0
        %521 = vmatprep.subr.bf16.mxu0 0
        %522 = vmatpush1.bf16.msra.mxu0 0
        %523 = vmatprep.subr.bf16.mxu0 0
        %524 = vmatpush1.bf16.msra.mxu0 0
        %525 = vmatprep.subr.bf16.mxu0 0
        %526 = vmatpush1.bf16.msra.mxu0 0
        %527 = vmatprep.subr.bf16.mxu0 0
        %528 = vmatpush1.bf16.msra.mxu0 0
        %529 = vmatprep.subr.bf16.mxu0 0
        %530 = vmatpush1.bf16.msra.mxu0 0
        %531 = vmatprep.subr.bf16.mxu0 0
        %532 = vmatpush1.bf16.msra.mxu0 0
        %533 = vmatprep.mubr.bf16.mxu0 0
        %534 = vmatmul.mubr.bf16.gmra.mrb[0].mxu0 %v499
        %v535 = vpop.f32.mrb[0].mxu0
        %v536 = vadd.f32 %v492, %v535
        %v537 = vpop.f32.mrb[0].mxu0
        %v538 = vadd.f32 %v494, %v537
        %v539 = vpop.f32.mrb[0].mxu0
        %v540 = vpop.f32.mrb[0].mxu0
        %541 = vdwg.mxu0
        %v542 = vld [vmem:[%s334] sm:$0xff]
        %v543 = vld [vmem:[%s334 + $0x8] sm:$0xf]
        %v544 = vld [vmem:[%s334 + $0xc] sm:$0xff]
        %v545 = vld [vmem:[%s334 + $0x14] sm:$0xf]
        %v550 = vunpack.c.l.b16 %v542
        %v551 = vunpack.c.h.b16 %v542
        %v552 = vunpack.c.l.b16 %v543
        %v553 = vunpack.c.l.b16 %v544
        %v554 = vunpack.c.h.b16 %v544
        %v555 = vunpack.c.l.b16 %v545
        %v556 = vpack.c.b16 %v553, %v550
        %v557 = vpack.c.b16 %v554, %v551
        %v558 = vpack.c.b16 %v555, %v552
        %559 = vrot.lane.b32.xlu0 %v556, 127
        %v560 = vpop.permute.xlu0 %559
        %561 = vrot.lane.b32.xlu0 %v557, 127
        %v562 = vpop.permute.xlu0 %561
        %563 = vrot.lane.b32.xlu0 %v558, 127
        %v564 = vpop.permute.xlu0 %563
        %v565 = vsel %vm395, %v560, %v562
        %v566 = vsel %vm395, %v562, %v564
        %567 = vrot.lane.b32.xlu0 %v556, 126
        %v568 = vpop.permute.xlu0 %567
        %569 = vrot.lane.b32.xlu0 %v557, 126
        %v570 = vpop.permute.xlu0 %569
        %571 = vrot.lane.b32.xlu0 %v558, 126
        %v572 = vpop.permute.xlu0 %571
        %v573 = vsel %vm406, %v568, %v570
        %v574 = vsel %vm406, %v570, %v572
        %v575 = vld [vmem:[%s1] sm:$0xf]
        %v578 = vunpack.c.l.s4 1983009808
        %v579 = vunpack.c.0.s8 %v578
        %v580 = vlaneseq
        %v581 = vshrl.u32 %v580, 7
        %v582 = vsub.s32 %v579, %v581
        %v583 = vrot.slane %v575, %v582
        %v584 = vcombine.high %v583, %v583
        %585 = vrot.lane.b32.xlu0 %v583, 32
        %v586 = vpop.permute.xlu0 %585
        %587 = vrot.lane.b32.xlu0 %v584, 32
        %v588 = vpop.permute.xlu0 %587
        %vm589 = vcmask 261120
        %v590 = vsel %vm589, %v586, %v588
        %591 = vrot.lane.b32.xlu0 %v556, 92
        %v592 = vpop.permute.xlu0 %591
        %593 = vrot.lane.b32.xlu0 %v557, 92
        %v594 = vpop.permute.xlu0 %593
        %595 = vrot.lane.b32.xlu0 %v558, 92
        %v596 = vpop.permute.xlu0 %595
        %597 = vrot.lane.b32.xlu0 %v565, 92
        %v598 = vpop.permute.xlu0 %597
        %599 = vrot.lane.b32.xlu0 %v566, 92
        %v600 = vpop.permute.xlu0 %599
        %601 = vrot.lane.b32.xlu0 %v564, 92
        %v602 = vpop.permute.xlu0 %601
        %603 = vrot.lane.b32.xlu0 %v573, 92
        %v604 = vpop.permute.xlu0 %603
        %605 = vrot.lane.b32.xlu0 %v574, 92
        %v606 = vpop.permute.xlu0 %605
        %607 = vrot.lane.b32.xlu0 %v572, 92
        %v608 = vpop.permute.xlu0 %607
        %vm609 = vcmask 752640
        %v610 = vsel %vm609, %v592, %v594
        %v611 = vsel %vm609, %v594, %v596
        %v612 = vsel %vm609, %v598, %v600
        %v613 = vsel %vm609, %v600, %v602
        %v614 = vsel %vm609, %v604, %v606
        %v615 = vsel %vm609, %v606, %v608
        %v623 = vsel %vm453, %v590, 0
        %625 = vmatprep.subr.bf16.mxu0 %v611
        %626 = vmatpush1.bf16.msra.mxu0 %v610
        %627 = vmatprep.subr.bf16.mxu0 %v613
        %628 = vmatpush1.bf16.msra.mxu0 %v612
        %629 = vmatprep.subr.bf16.mxu0 %v615
        %630 = vmatpush1.bf16.msra.mxu0 %v614
        %631 = vmatprep.subr.bf16.mxu0 0
        %632 = vmatpush1.bf16.msra.mxu0 0
        %633 = vmatprep.subr.bf16.mxu0 0
        %634 = vmatpush1.bf16.msra.mxu0 0
        %635 = vmatprep.subr.bf16.mxu0 0
        %636 = vmatpush1.bf16.msra.mxu0 0
        %637 = vmatprep.subr.bf16.mxu0 0
        %638 = vmatpush1.bf16.msra.mxu0 0
        %639 = vmatprep.subr.bf16.mxu0 0
        %640 = vmatpush1.bf16.msra.mxu0 0
        %641 = vmatprep.subr.bf16.mxu0 0
        %642 = vmatpush1.bf16.msra.mxu0 0
        %643 = vmatprep.subr.bf16.mxu0 0
        %644 = vmatpush1.bf16.msra.mxu0 0
        %645 = vmatprep.subr.bf16.mxu0 0
        %646 = vmatpush1.bf16.msra.mxu0 0
        %647 = vmatprep.subr.bf16.mxu0 0
        %648 = vmatpush1.bf16.msra.mxu0 0
        %649 = vmatprep.subr.bf16.mxu0 0
        %650 = vmatpush1.bf16.msra.mxu0 0
        %651 = vmatprep.subr.bf16.mxu0 0
        %652 = vmatpush1.bf16.msra.mxu0 0
        %653 = vmatprep.subr.bf16.mxu0 0
        %654 = vmatpush1.bf16.msra.mxu0 0
        %655 = vmatprep.subr.bf16.mxu0 0
        %656 = vmatpush1.bf16.msra.mxu0 0
        %657 = vmatprep.mubr.bf16.mxu0 0
        %658 = vmatmul.mubr.bf16.gmra.mrb[0].mxu0 %v623
        %v659 = vpop.f32.mrb[0].mxu0
        %v660 = vadd.f32 0.0, %v659
        %v661 = vpop.f32.mrb[0].mxu0
        %v662 = vadd.f32 0.0, %v661
        %v663 = vpop.f32.mrb[0].mxu0
        %v664 = vpop.f32.mrb[0].mxu0
        %665 = vdwg.mxu0
        %v666 = vadd.f32 %v536, %v660
        %v667 = vadd.f32 %v538, %v662
        %v668 = vld [vmem:[%s2] sm:$0xf]
        %670 = vset.pattern.permute.xlu0 0
        %671 = vperm.xlu0 %670, %v668
        %v672 = vpop.permute.xlu0 %671
        %v674 = vmul.f32 %v666, %v672
        %v675 = vmul.f32 %v667, %v672
        %v676 = vld [vmem:[%s3] sm:$0xf]
        %678 = vset.pattern.permute.xlu0 0
        %679 = vperm.xlu0 %678, %v676
        %v680 = vpop.permute.xlu0 %679
        %v682 = vadd.f32 %v674, %v680
        %v683 = vadd.f32 %v675, %v680
        %v684 = vmax.f32 %v682, 0.0
        %v685 = vmax.f32 %v683, 0.0
        %v686 = vld [vmem:[%s4] sm:$0xff]
        %v687 = vld [vmem:[%s4 + $0x8] sm:$0xff]
        %689 = vset.pattern.permute.xlu0 0
        %690 = vperm.xlu0 %689, %v686
        %v691 = vpop.permute.xlu0 %690
        %694 = vset.pattern.permute.xlu0 0
        %695 = vperm.xlu0 %694, %v687
        %v696 = vpop.permute.xlu0 %695
        %v698 = vlaneseq
        %v699 = vshrl.u32 %v698, 7
        %v700 = vsub.s32 0, %v699
        %v701 = vrot.slane %v684, %v700
        %v702 = vlaneseq
        %v703 = vshrl.u32 %v702, 7
        %v704 = vsub.s32 0, %v703
        %v705 = vrot.slane %v685, %v704
        %v706 = vmul.f32 %v691, %v701
        %v707 = vmul.f32 %v691, %v705
        %v708 = vmul.f32 %v696, %v701
        %v709 = vmul.f32 %v696, %v705
        %710 = vset.pattern.permute.xlu0 1
        %711 = vperm.xlu0 %710, %v686
        %v712 = vpop.permute.xlu0 %711
        %714 = vset.pattern.permute.xlu0 1
        %715 = vperm.xlu0 %714, %v687
        %v716 = vpop.permute.xlu0 %715
        %v718 = vlaneseq
        %v719 = vshrl.u32 %v718, 7
        %v720 = vsub.s32 1, %v719
        %v721 = vrot.slane %v684, %v720
        %v722 = vlaneseq
        %v723 = vshrl.u32 %v722, 7
        %v724 = vsub.s32 1, %v723
        %v725 = vrot.slane %v685, %v724
        %v726 = vmul.f32 %v712, %v721
        %v727 = vmul.f32 %v712, %v725
        %v728 = vmul.f32 %v716, %v721
        %v729 = vmul.f32 %v716, %v725
        %v730 = vadd.f32 %v706, %v726
        %v731 = vadd.f32 %v707, %v727
        %v732 = vadd.f32 %v708, %v728
        %v733 = vadd.f32 %v709, %v729
        %734 = vset.pattern.permute.xlu0 2
        %735 = vperm.xlu0 %734, %v686
        %v736 = vpop.permute.xlu0 %735
        %738 = vset.pattern.permute.xlu0 2
        %739 = vperm.xlu0 %738, %v687
        %v740 = vpop.permute.xlu0 %739
        %v742 = vlaneseq
        %v743 = vshrl.u32 %v742, 7
        %v744 = vsub.s32 2, %v743
        %v745 = vrot.slane %v684, %v744
        %v746 = vlaneseq
        %v747 = vshrl.u32 %v746, 7
        %v748 = vsub.s32 2, %v747
        %v749 = vrot.slane %v685, %v748
        %v750 = vmul.f32 %v736, %v745
        %v751 = vmul.f32 %v736, %v749
        %v752 = vmul.f32 %v740, %v745
        %v753 = vmul.f32 %v740, %v749
        %v754 = vadd.f32 %v730, %v750
        %v755 = vadd.f32 %v731, %v751
        %v756 = vadd.f32 %v732, %v752
        %v757 = vadd.f32 %v733, %v753
        %758 = vset.pattern.permute.xlu0 3
        %759 = vperm.xlu0 %758, %v686
        %v760 = vpop.permute.xlu0 %759
        %762 = vset.pattern.permute.xlu0 3
        %763 = vperm.xlu0 %762, %v687
        %v764 = vpop.permute.xlu0 %763
        %v766 = vlaneseq
        %v767 = vshrl.u32 %v766, 7
        %v768 = vsub.s32 3, %v767
        %v769 = vrot.slane %v684, %v768
        %v770 = vlaneseq
        %v771 = vshrl.u32 %v770, 7
        %v772 = vsub.s32 3, %v771
        %v773 = vrot.slane %v685, %v772
        %v774 = vmul.f32 %v760, %v769
        %v775 = vmul.f32 %v760, %v773
        %v776 = vmul.f32 %v764, %v769
        %v777 = vmul.f32 %v764, %v773
        %v778 = vadd.f32 %v754, %v774
        %v779 = vadd.f32 %v755, %v775
        %v780 = vadd.f32 %v756, %v776
        %v781 = vadd.f32 %v757, %v777
        %v782 = vld [vmem:[%s5] sm:$0xff]
        %v783 = vld [vmem:[%s5 + $0x8] sm:$0xff]
        %785 = vset.pattern.permute.xlu0 0
        %786 = vperm.xlu0 %785, %v782
        %v787 = vpop.permute.xlu0 %786
        %790 = vset.pattern.permute.xlu0 0
        %791 = vperm.xlu0 %790, %v783
        %v792 = vpop.permute.xlu0 %791
        %v794 = vmul.f32 %v778, %v787
        %v795 = vmul.f32 %v779, %v787
        %v796 = vmul.f32 %v780, %v792
        %v797 = vmul.f32 %v781, %v792
        %v798 = vld [vmem:[%s6] sm:$0xff]
        %v799 = vld [vmem:[%s6 + $0x8] sm:$0xff]
        %801 = vset.pattern.permute.xlu0 0
        %802 = vperm.xlu0 %801, %v798
        %v803 = vpop.permute.xlu0 %802
        %806 = vset.pattern.permute.xlu0 0
        %807 = vperm.xlu0 %806, %v799
        %v808 = vpop.permute.xlu0 %807
        %v810 = vadd.f32 %v794, %v803
        %v811 = vadd.f32 %v795, %v803
        %v812 = vadd.f32 %v796, %v808
        %v813 = vadd.f32 %v797, %v808
        %v814 = vmax.f32 %v810, 0.0
        %v815 = vmax.f32 %v811, 0.0
        %v816 = vmax.f32 %v812, 0.0
        %v817 = vmax.f32 %v813, 0.0
        %v818 = vld [vmem:[%s7] sm:$0xff]
        %v819 = vld [vmem:[%s7 + $0x8] sm:$0xff]
        %821 = vset.pattern.permute.xlu0 0
        %822 = vperm.xlu0 %821, %v818
        %v823 = vpop.permute.xlu0 %822
        %826 = vset.pattern.permute.xlu0 0
        %827 = vperm.xlu0 %826, %v819
        %v828 = vpop.permute.xlu0 %827
        %v830 = vlaneseq
        %v831 = vshrl.u32 %v830, 7
        %v832 = vsub.s32 0, %v831
        %v833 = vrot.slane %v814, %v832
        %v834 = vlaneseq
        %v835 = vshrl.u32 %v834, 7
        %v836 = vsub.s32 0, %v835
        %v837 = vrot.slane %v815, %v836
        %v838 = vmul.f32 %v823, %v833
        %v839 = vmul.f32 %v823, %v837
        %v840 = vmul.f32 %v828, %v833
        %v841 = vmul.f32 %v828, %v837
        %842 = vset.pattern.permute.xlu0 1
        %843 = vperm.xlu0 %842, %v818
        %v844 = vpop.permute.xlu0 %843
        %846 = vset.pattern.permute.xlu0 1
        %847 = vperm.xlu0 %846, %v819
        %v848 = vpop.permute.xlu0 %847
        %v850 = vlaneseq
        %v851 = vshrl.u32 %v850, 7
        %v852 = vsub.s32 1, %v851
        %v853 = vrot.slane %v814, %v852
        %v854 = vlaneseq
        %v855 = vshrl.u32 %v854, 7
        %v856 = vsub.s32 1, %v855
        %v857 = vrot.slane %v815, %v856
        %v858 = vmul.f32 %v844, %v853
        %v859 = vmul.f32 %v844, %v857
        %v860 = vmul.f32 %v848, %v853
        %v861 = vmul.f32 %v848, %v857
        %v862 = vadd.f32 %v838, %v858
        %v863 = vadd.f32 %v839, %v859
        %v864 = vadd.f32 %v840, %v860
        %v865 = vadd.f32 %v841, %v861
        %866 = vset.pattern.permute.xlu0 2
        %867 = vperm.xlu0 %866, %v818
        %v868 = vpop.permute.xlu0 %867
        %870 = vset.pattern.permute.xlu0 2
        %871 = vperm.xlu0 %870, %v819
        %v872 = vpop.permute.xlu0 %871
        %v874 = vlaneseq
        %v875 = vshrl.u32 %v874, 7
        %v876 = vsub.s32 2, %v875
        %v877 = vrot.slane %v814, %v876
        %v878 = vlaneseq
        %v879 = vshrl.u32 %v878, 7
        %v880 = vsub.s32 2, %v879
        %v881 = vrot.slane %v815, %v880
        %v882 = vmul.f32 %v868, %v877
        %v883 = vmul.f32 %v868, %v881
        %v884 = vmul.f32 %v872, %v877
        %v885 = vmul.f32 %v872, %v881
        %v886 = vadd.f32 %v862, %v882
        %v887 = vadd.f32 %v863, %v883
        %v888 = vadd.f32 %v864, %v884
        %v889 = vadd.f32 %v865, %v885
        %890 = vset.pattern.permute.xlu0 3
        %891 = vperm.xlu0 %890, %v818
        %v892 = vpop.permute.xlu0 %891
        %894 = vset.pattern.permute.xlu0 3
        %895 = vperm.xlu0 %894, %v819
        %v896 = vpop.permute.xlu0 %895
        %v898 = vlaneseq
        %v899 = vshrl.u32 %v898, 7
        %v900 = vsub.s32 3, %v899
        %v901 = vrot.slane %v814, %v900
        %v902 = vlaneseq
        %v903 = vshrl.u32 %v902, 7
        %v904 = vsub.s32 3, %v903
        %v905 = vrot.slane %v815, %v904
        %v906 = vmul.f32 %v892, %v901
        %v907 = vmul.f32 %v892, %v905
        %v908 = vmul.f32 %v896, %v901
        %v909 = vmul.f32 %v896, %v905
        %v910 = vadd.f32 %v886, %v906
        %v911 = vadd.f32 %v887, %v907
        %v912 = vadd.f32 %v888, %v908
        %v913 = vadd.f32 %v889, %v909
        %914 = vset.pattern.permute.xlu0 4
        %915 = vperm.xlu0 %914, %v818
        %v916 = vpop.permute.xlu0 %915
        %918 = vset.pattern.permute.xlu0 4
        %919 = vperm.xlu0 %918, %v819
        %v920 = vpop.permute.xlu0 %919
        %v922 = vlaneseq
        %v923 = vshrl.u32 %v922, 7
        %v924 = vsub.s32 4, %v923
        %v925 = vrot.slane %v814, %v924
        %v926 = vlaneseq
        %v927 = vshrl.u32 %v926, 7
        %v928 = vsub.s32 4, %v927
        %v929 = vrot.slane %v815, %v928
        %v930 = vmul.f32 %v916, %v925
        %v931 = vmul.f32 %v916, %v929
        %v932 = vmul.f32 %v920, %v925
        %v933 = vmul.f32 %v920, %v929
        %v934 = vadd.f32 %v910, %v930
        %v935 = vadd.f32 %v911, %v931
        %v936 = vadd.f32 %v912, %v932
        %v937 = vadd.f32 %v913, %v933
        %938 = vset.pattern.permute.xlu0 5
        %939 = vperm.xlu0 %938, %v818
        %v940 = vpop.permute.xlu0 %939
        %942 = vset.pattern.permute.xlu0 5
        %943 = vperm.xlu0 %942, %v819
        %v944 = vpop.permute.xlu0 %943
        %v946 = vlaneseq
        %v947 = vshrl.u32 %v946, 7
        %v948 = vsub.s32 5, %v947
        %v949 = vrot.slane %v814, %v948
        %v950 = vlaneseq
        %v951 = vshrl.u32 %v950, 7
        %v952 = vsub.s32 5, %v951
        %v953 = vrot.slane %v815, %v952
        %v954 = vmul.f32 %v940, %v949
        %v955 = vmul.f32 %v940, %v953
        %v956 = vmul.f32 %v944, %v949
        %v957 = vmul.f32 %v944, %v953
        %v958 = vadd.f32 %v934, %v954
        %v959 = vadd.f32 %v935, %v955
        %v960 = vadd.f32 %v936, %v956
        %v961 = vadd.f32 %v937, %v957
        %962 = vset.pattern.permute.xlu0 6
        %963 = vperm.xlu0 %962, %v818
        %v964 = vpop.permute.xlu0 %963
        %966 = vset.pattern.permute.xlu0 6
        %967 = vperm.xlu0 %966, %v819
        %v968 = vpop.permute.xlu0 %967
        %v970 = vlaneseq
        %v971 = vshrl.u32 %v970, 7
        %v972 = vsub.s32 6, %v971
        %v973 = vrot.slane %v814, %v972
        %v974 = vlaneseq
        %v975 = vshrl.u32 %v974, 7
        %v976 = vsub.s32 6, %v975
        %v977 = vrot.slane %v815, %v976
        %v978 = vmul.f32 %v964, %v973
        %v979 = vmul.f32 %v964, %v977
        %v980 = vmul.f32 %v968, %v973
        %v981 = vmul.f32 %v968, %v977
        %v982 = vadd.f32 %v958, %v978
        %v983 = vadd.f32 %v959, %v979
        %v984 = vadd.f32 %v960, %v980
        %v985 = vadd.f32 %v961, %v981
        %986 = vset.pattern.permute.xlu0 7
        %987 = vperm.xlu0 %986, %v818
        %v988 = vpop.permute.xlu0 %987
        %990 = vset.pattern.permute.xlu0 7
        %991 = vperm.xlu0 %990, %v819
        %v992 = vpop.permute.xlu0 %991
        %v994 = vlaneseq
        %v995 = vshrl.u32 %v994, 7
        %v996 = vsub.s32 7, %v995
        %v997 = vrot.slane %v814, %v996
        %v998 = vlaneseq
        %v999 = vshrl.u32 %v998, 7
        %v1000 = vsub.s32 7, %v999
        %v1001 = vrot.slane %v815, %v1000
        %v1002 = vmul.f32 %v988, %v997
        %v1003 = vmul.f32 %v988, %v1001
        %v1004 = vmul.f32 %v992, %v997
        %v1005 = vmul.f32 %v992, %v1001
        %v1006 = vadd.f32 %v982, %v1002
        %v1007 = vadd.f32 %v983, %v1003
        %v1008 = vadd.f32 %v984, %v1004
        %v1009 = vadd.f32 %v985, %v1005
        %1010 = vset.pattern.permute.xlu0 8
        %1011 = vperm.xlu0 %1010, %v818
        %v1012 = vpop.permute.xlu0 %1011
        %1014 = vset.pattern.permute.xlu0 8
        %1015 = vperm.xlu0 %1014, %v819
        %v1016 = vpop.permute.xlu0 %1015
        %v1018 = vlaneseq
        %v1019 = vshrl.u32 %v1018, 7
        %v1020 = vsub.s32 0, %v1019
        %v1021 = vrot.slane %v816, %v1020
        %v1022 = vlaneseq
        %v1023 = vshrl.u32 %v1022, 7
        %v1024 = vsub.s32 0, %v1023
        %v1025 = vrot.slane %v817, %v1024
        %v1026 = vmul.f32 %v1012, %v1021
        %v1027 = vmul.f32 %v1012, %v1025
        %v1028 = vmul.f32 %v1016, %v1021
        %v1029 = vmul.f32 %v1016, %v1025
        %v1030 = vadd.f32 %v1006, %v1026
        %v1031 = vadd.f32 %v1007, %v1027
        %v1032 = vadd.f32 %v1008, %v1028
        %v1033 = vadd.f32 %v1009, %v1029
        %1034 = vset.pattern.permute.xlu0 9
        %1035 = vperm.xlu0 %1034, %v818
        %v1036 = vpop.permute.xlu0 %1035
        %1038 = vset.pattern.permute.xlu0 9
        %1039 = vperm.xlu0 %1038, %v819
        %v1040 = vpop.permute.xlu0 %1039
        %v1042 = vlaneseq
        %v1043 = vshrl.u32 %v1042, 7
        %v1044 = vsub.s32 1, %v1043
        %v1045 = vrot.slane %v816, %v1044
        %v1046 = vlaneseq
        %v1047 = vshrl.u32 %v1046, 7
        %v1048 = vsub.s32 1, %v1047
        %v1049 = vrot.slane %v817, %v1048
        %v1050 = vmul.f32 %v1036, %v1045
        %v1051 = vmul.f32 %v1036, %v1049
        %v1052 = vmul.f32 %v1040, %v1045
        %v1053 = vmul.f32 %v1040, %v1049
        %v1054 = vadd.f32 %v1030, %v1050
        %v1055 = vadd.f32 %v1031, %v1051
        %v1056 = vadd.f32 %v1032, %v1052
        %v1057 = vadd.f32 %v1033, %v1053
        %1058 = vset.pattern.permute.xlu0 10
        %1059 = vperm.xlu0 %1058, %v818
        %v1060 = vpop.permute.xlu0 %1059
        %1062 = vset.pattern.permute.xlu0 10
        %1063 = vperm.xlu0 %1062, %v819
        %v1064 = vpop.permute.xlu0 %1063
        %v1066 = vlaneseq
        %v1067 = vshrl.u32 %v1066, 7
        %v1068 = vsub.s32 2, %v1067
        %v1069 = vrot.slane %v816, %v1068
        %v1070 = vlaneseq
        %v1071 = vshrl.u32 %v1070, 7
        %v1072 = vsub.s32 2, %v1071
        %v1073 = vrot.slane %v817, %v1072
        %v1074 = vmul.f32 %v1060, %v1069
        %v1075 = vmul.f32 %v1060, %v1073
        %v1076 = vmul.f32 %v1064, %v1069
        %v1077 = vmul.f32 %v1064, %v1073
        %v1078 = vadd.f32 %v1054, %v1074
        %v1079 = vadd.f32 %v1055, %v1075
        %v1080 = vadd.f32 %v1056, %v1076
        %v1081 = vadd.f32 %v1057, %v1077
        %1082 = vset.pattern.permute.xlu0 11
        %1083 = vperm.xlu0 %1082, %v818
        %v1084 = vpop.permute.xlu0 %1083
        %1086 = vset.pattern.permute.xlu0 11
        %1087 = vperm.xlu0 %1086, %v819
        %v1088 = vpop.permute.xlu0 %1087
        %v1090 = vlaneseq
        %v1091 = vshrl.u32 %v1090, 7
        %v1092 = vsub.s32 3, %v1091
        %v1093 = vrot.slane %v816, %v1092
        %v1094 = vlaneseq
        %v1095 = vshrl.u32 %v1094, 7
        %v1096 = vsub.s32 3, %v1095
        %v1097 = vrot.slane %v817, %v1096
        %v1098 = vmul.f32 %v1084, %v1093
        %v1099 = vmul.f32 %v1084, %v1097
        %v1100 = vmul.f32 %v1088, %v1093
        %v1101 = vmul.f32 %v1088, %v1097
        %v1102 = vadd.f32 %v1078, %v1098
        %v1103 = vadd.f32 %v1079, %v1099
        %v1104 = vadd.f32 %v1080, %v1100
        %v1105 = vadd.f32 %v1081, %v1101
        %1106 = vset.pattern.permute.xlu0 12
        %1107 = vperm.xlu0 %1106, %v818
        %v1108 = vpop.permute.xlu0 %1107
        %1110 = vset.pattern.permute.xlu0 12
        %1111 = vperm.xlu0 %1110, %v819
        %v1112 = vpop.permute.xlu0 %1111
        %v1114 = vlaneseq
        %v1115 = vshrl.u32 %v1114, 7
        %v1116 = vsub.s32 4, %v1115
        %v1117 = vrot.slane %v816, %v1116
        %v1118 = vlaneseq
        %v1119 = vshrl.u32 %v1118, 7
        %v1120 = vsub.s32 4, %v1119
        %v1121 = vrot.slane %v817, %v1120
        %v1122 = vmul.f32 %v1108, %v1117
        %v1123 = vmul.f32 %v1108, %v1121
        %v1124 = vmul.f32 %v1112, %v1117
        %v1125 = vmul.f32 %v1112, %v1121
        %v1126 = vadd.f32 %v1102, %v1122
        %v1127 = vadd.f32 %v1103, %v1123
        %v1128 = vadd.f32 %v1104, %v1124
        %v1129 = vadd.f32 %v1105, %v1125
        %1130 = vset.pattern.permute.xlu0 13
        %1131 = vperm.xlu0 %1130, %v818
        %v1132 = vpop.permute.xlu0 %1131
        %1134 = vset.pattern.permute.xlu0 13
        %1135 = vperm.xlu0 %1134, %v819
        %v1136 = vpop.permute.xlu0 %1135
        %v1138 = vlaneseq
        %v1139 = vshrl.u32 %v1138, 7
        %v1140 = vsub.s32 5, %v1139
        %v1141 = vrot.slane %v816, %v1140
        %v1142 = vlaneseq
        %v1143 = vshrl.u32 %v1142, 7
        %v1144 = vsub.s32 5, %v1143
        %v1145 = vrot.slane %v817, %v1144
        %v1146 = vmul.f32 %v1132, %v1141
        %v1147 = vmul.f32 %v1132, %v1145
        %v1148 = vmul.f32 %v1136, %v1141
        %v1149 = vmul.f32 %v1136, %v1145
        %v1150 = vadd.f32 %v1126, %v1146
        %v1151 = vadd.f32 %v1127, %v1147
        %v1152 = vadd.f32 %v1128, %v1148
        %v1153 = vadd.f32 %v1129, %v1149
        %1154 = vset.pattern.permute.xlu0 14
        %1155 = vperm.xlu0 %1154, %v818
        %v1156 = vpop.permute.xlu0 %1155
        %1158 = vset.pattern.permute.xlu0 14
        %1159 = vperm.xlu0 %1158, %v819
        %v1160 = vpop.permute.xlu0 %1159
        %v1162 = vlaneseq
        %v1163 = vshrl.u32 %v1162, 7
        %v1164 = vsub.s32 6, %v1163
        %v1165 = vrot.slane %v816, %v1164
        %v1166 = vlaneseq
        %v1167 = vshrl.u32 %v1166, 7
        %v1168 = vsub.s32 6, %v1167
        %v1169 = vrot.slane %v817, %v1168
        %v1170 = vmul.f32 %v1156, %v1165
        %v1171 = vmul.f32 %v1156, %v1169
        %v1172 = vmul.f32 %v1160, %v1165
        %v1173 = vmul.f32 %v1160, %v1169
        %v1174 = vadd.f32 %v1150, %v1170
        %v1175 = vadd.f32 %v1151, %v1171
        %v1176 = vadd.f32 %v1152, %v1172
        %v1177 = vadd.f32 %v1153, %v1173
        %1178 = vset.pattern.permute.xlu0 15
        %1179 = vperm.xlu0 %1178, %v818
        %v1180 = vpop.permute.xlu0 %1179
        %1182 = vset.pattern.permute.xlu0 15
        %1183 = vperm.xlu0 %1182, %v819
        %v1184 = vpop.permute.xlu0 %1183
        %v1186 = vlaneseq
        %v1187 = vshrl.u32 %v1186, 7
        %v1188 = vsub.s32 7, %v1187
        %v1189 = vrot.slane %v816, %v1188
        %v1190 = vlaneseq
        %v1191 = vshrl.u32 %v1190, 7
        %v1192 = vsub.s32 7, %v1191
        %v1193 = vrot.slane %v817, %v1192
        %v1194 = vmul.f32 %v1180, %v1189
        %v1195 = vmul.f32 %v1180, %v1193
        %v1196 = vmul.f32 %v1184, %v1189
        %v1197 = vmul.f32 %v1184, %v1193
        %v1198 = vadd.f32 %v1174, %v1194
        %v1199 = vadd.f32 %v1175, %v1195
        %v1200 = vadd.f32 %v1176, %v1196
        %v1201 = vadd.f32 %v1177, %v1197
        %v1202 = vld [vmem:[%s8] sm:$0xff]
        %v1203 = vld [vmem:[%s8 + $0x8] sm:$0xff]
        %1205 = vset.pattern.permute.xlu0 0
        %1206 = vperm.xlu0 %1205, %v1202
        %v1207 = vpop.permute.xlu0 %1206
        %1210 = vset.pattern.permute.xlu0 0
        %1211 = vperm.xlu0 %1210, %v1203
        %v1212 = vpop.permute.xlu0 %1211
        %v1214 = vadd.f32 %v1198, %v1207
        %v1215 = vadd.f32 %v1199, %v1207
        %v1216 = vadd.f32 %v1200, %v1212
        %v1217 = vadd.f32 %v1201, %v1212
        %v1218 = vmul.f32 %v1214, 0.5
        %v1219 = vmul.f32 %v1215, 0.5
        %v1220 = vmul.f32 %v1216, 0.5
        %v1221 = vmul.f32 %v1217, 0.5
        %v1222 = vtanh.pop %v1218
        %v1223 = vtanh.pop %v1219
        %v1224 = vtanh.pop %v1220
        %v1225 = vtanh.pop %v1221
        %v1226 = vadd.f32 %v1222, 1.0
        %v1227 = vadd.f32 %v1223, 1.0
        %v1228 = vadd.f32 %v1224, 1.0
        %v1229 = vadd.f32 %v1225, 1.0
        %v1230 = vmul.f32 %v1226, 0.5
        %v1231 = vmul.f32 %v1227, 0.5
        %v1232 = vmul.f32 %v1228, 0.5
        %v1233 = vmul.f32 %v1229, 0.5
        %1234 = vst [vmem:[%s368] sm:$0xff] %v1230
        %1235 = vst [vmem:[%s368 + $0x8] sm:$0xff] %v1231
        %1236 = vst [vmem:[%s368 + $0x10] sm:$0xff] %v1232
        %1237 = vst [vmem:[%s368 + $0x18] sm:$0xff] %v1233
        %s1238 = sand.u32 %s244, 1
        %s1239 = scalar_lea.sflag [#allocation4], %s1238
        %s1240 = sand.u32 %s244, 1
        %s1241 = smul.addr %s1240, 32
        %s1242 = scalar_lea.vmem [#allocation5], %s1241
        // Predicated region
        $region61: #{tpu_custom_call.1} parent=55 // pred_check
          %p1243 = pneg %p254
        $region62: #{tpu_custom_call.1} parent=55 // pred_check_branch
          %1245 = sbr.rel (%p1243) target = $region64
        $region63: #{tpu_custom_call.1} parent=55 // pred_region
          %s1247 = ssub.s32 512, 512
          %1248 = vsyncadd %s1239, %s1247
          %s1249 = smul.addr %s31, 4
          %s1250 = smul.addr %s30, 8
          %s1251 = sadd.s32 %s1249, %s1250
          %s1252 = smul.addr %s1251, 128
          %s1253 = scalar_lea.hbm %s9, %s1252
          %s1254 = sshll.u32 %s1242, 4
          %s1255 = int_to_ptr.vmem [resolvable:$true] %s1254
          %1260 = dma.vmem_to_hbm [thread:$0]  %s1255, 512, %s1253, %s1239, 256, 256, 16
        $region64: #{tpu_custom_call.1} parent=55 // pred_fallthru
          _
      $region56: #{tpu_custom_call.1} parent=5 // pred_fallthru
        _
      %p1261 = scmp.le.s32.totalorder 2, %s21
      // Predicated region
      $region65: #{tpu_custom_call.1} parent=5 // pred_check
        %p1262 = pneg %p1261
      $region66: #{tpu_custom_call.1} parent=5 // pred_check_branch
        %1264 = sbr.rel (%p1262) target = $region68
      $region67: #{tpu_custom_call.1} parent=5 // pred_region
        %s1265 = ssub.s32 %s21, 2
        // Predicated region
        $region69: #{tpu_custom_call.1} parent=67 // pred_check
          %p1266 = pneg %p260
        $region70: #{tpu_custom_call.1} parent=67 // pred_check_branch
          %1268 = sbr.rel (%p1266) target = $region72
        $region71: #{tpu_custom_call.1} parent=67 // pred_region
          %s1269 = sand.u32 %s245, 1
          %s1270 = scalar_lea.sflag [#allocation4], %s1269
          %s1271 = sand.u32 %s245, 1
          %s1272 = smul.addr %s1271, 32
          %s1273 = scalar_lea.vmem [#allocation5], %s1272
          %1274 = dma.done %s1270, 512
        $region72: #{tpu_custom_call.1} parent=67 // pred_fallthru
          _
      $region68: #{tpu_custom_call.1} parent=5 // pred_fallthru
        _
    $region6: #{tpu_custom_call.1} parent=1 // loop_footer
      %s25 = sadd.s32 1, %s21
    $region7: #{tpu_custom_call.1} parent=1 // loop_footer_branch
      %20 = sbr.rel target = $region3
    $region8: #{tpu_custom_call.1} parent=1 // loop_exit
      _
    %1275 = vsyncpa [#allocation3], 1
    %s1276 = scalar_lea.sflag [#allocation3], 1
    %1277 = vsyncpa %s1276, 1
    %1278 = vsyncpa [#allocation4], 1
    %s1279 = scalar_lea.sflag [#allocation4], 1
    %1280 = vsyncpa %s1279, 1

</llo_original>
